<compile_context>
chip_gen: v6e
topology: v6e:2x2x1
jax: 0.10.0
libtpu: 0.0.40
codegen_flags: <defaults>
</compile_context>

<pallas_src>
import functools

import jax
import jax.numpy as jnp
import numpy as np
from jax import lax
from jax.experimental import pallas as pl
from jax.experimental.pallas import tpu as pltpu

THRESH = 0.3  # spiking threshold constant (module-level `thresh` in PyTorch)


def _tesnn_kernel(x_ref, ce1_ref, ce2_ref,
                  wi1_ref, b1_ref, wcat_ref, bi2_ref, wo_ref, bo_ref,
                  out_ref,
                  mem1_s, spk1_s, th1_s, rec1_s, mem2_s, spk2_s, th2_s,
                  xproj_buf, spk2_buf,
                  *, decay, co2, t_chunk, h1p, tail, last_only, buffer_spk2,
                  compute_dtype):
    c = pl.program_id(1)                      # time-chunk index (sequential)
    nb, h0p = mem1_s.shape
    in_sz = x_ref.shape[2]

    # Re-initialise recurrent state at the start of each batch shard's
    # time recurrence (state persists in VMEM scratch across the chunk axis).
    @pl.when(c == 0)
    def _():
        mem1_s[...] = jnp.zeros_like(mem1_s)
        spk1_s[...] = jnp.zeros_like(spk1_s)
        th1_s[...] = jnp.full_like(th1_s, THRESH)
        rec1_s[...] = jnp.zeros_like(rec1_s)          # spk1(=0) @ Wh1
        mem2_s[...] = jnp.zeros_like(mem2_s)
        spk2_s[...] = jnp.zeros_like(spk2_s)
        th2_s[...] = jnp.full_like(th2_s, THRESH)

    # ---- whole-chunk input projection in ONE MXU call: x@Wi1 + (bi1+bh1) ----
    x_chunk = x_ref[...].reshape(t_chunk * nb, in_sz)
    xproj = jnp.dot(x_chunk, wi1_ref[...], preferred_element_type=jnp.float32)
    xproj_buf[...] = xproj.reshape(t_chunk, nb, h0p) + b1_ref[...]

    wcat = wcat_ref[...]        # (H0p, H1p + H0p) = [Wi2 | Wh1]
    bi2 = bi2_ref[...]

    # State carried in vregs across the chunk (spilled to scratch once/chunk).
    carry0 = (mem1_s[...], spk1_s[...], th1_s[...], rec1_s[...],
              mem2_s[...], spk2_s[...], th2_s[...])

    def step(tt, carry):
        mem1, spk1f, th1, rec1, mem2, spk2f, th2 = carry
        ce1_row = ce1_ref[pl.ds(tt, 1), :]            # (1, H0p)
        ce2_row = ce2_ref[pl.ds(tt, 1), :]            # (1, H1p)

        # layer 1: precomputed input projection + recurrent spk1_prev @ Wh1
        h1_in = xproj_buf[tt] + rec1
        th1_n = th1 + mem1 * ce1_row - (th1 - THRESH) * co2
        mem1_n = mem1 * decay * (1.0 - spk1f) + h1_in
        s1 = mem1_n > th1_n
        spk1_mxu = s1.astype(compute_dtype)

        # fused [spk1@Wi2 | spk1@Wh1]: one MXU round trip per timestep
        res = jnp.dot(spk1_mxu, wcat, preferred_element_type=jnp.float32)
        h2_in = res[:, :h1p] + bi2
        rec1_n = res[:, h1p:]                          # feeds step t+1

        # layer 2
        th2_n = th2 + mem2 * ce2_row - (th2 - THRESH) * co2
        mem2_n = mem2 * decay * (1.0 - spk2f) + h2_in
        s2 = mem2_n > th2_n
        if buffer_spk2:
            spk2_buf[tt] = s2.astype(compute_dtype)
        return (mem1_n, s1.astype(jnp.float32), th1_n, rec1_n,
                mem2_n, s2.astype(jnp.float32), th2_n)

    carry = lax.fori_loop(0, t_chunk, step, carry0, unroll=min(8, t_chunk))

    mem1, spk1f, th1, rec1, mem2, spk2f, th2 = carry
    mem1_s[...] = mem1
    spk1_s[...] = spk1f
    th1_s[...] = th1
    rec1_s[...] = rec1
    mem2_s[...] = mem2
    spk2_s[...] = spk2f
    th2_s[...] = th2

    # ---- readout: h2o_3(spike2) ----
    if last_only:
        # 'duration' / 'interval': only the final valid step's readout.
        @pl.when(c == pl.num_programs(1) - 1)
        def _():
            if buffer_spk2:
                s2_last = spk2_buf[tail - 1]          # static index: last valid step
            else:
                s2_last = spk2f.astype(compute_dtype)
            out_ref[...] = (jnp.dot(s2_last, wo_ref[...],
                                    preferred_element_type=jnp.float32)
                            + bo_ref[...]).astype(out_ref.dtype)
    else:
        # 'syn' / 'recall': one batched readout matmul + lane-dense store/chunk.
        op = out_ref.shape[-1]
        s2 = spk2_buf[...].reshape(t_chunk * nb, spk2_buf.shape[-1])
        o = jnp.dot(s2, wo_ref[...], preferred_element_type=jnp.float32)
        out_ref[...] = (o.reshape(t_chunk, nb, op) + bo_ref[...]).astype(out_ref.dtype)


def tesnn_forward(x, params, *, decay=0.5, beta=0.02, task='duration',
                  t_chunk=64, batch_block=None, use_bf16_matmul=False):
    """x: (N, in_size, T) float32.  params: dict of weights (see init_params)."""
    N, in_size, T = x.shape
    wi1, bi1 = params['i2h_1']   # (in, H0), (1, H0)
    wh1, bh1 = params['h2h_1']   # (H0, H0), (1, H0)
    wi2, bi2 = params['i2h_2']   # (H0, H1), (1, H1)
    wo, bo = params['h2o_3']     # (H1, O), (1, O)
    ce = params['ce']            # (H1, T)
    H0, H1, O = wi1.shape[1], wi2.shape[1], wo.shape[1]
    assert H0 <= H1, "module indexes ce[:H0] out of ce with H1 rows; requires H0 <= H1"

    last_only = task in ('duration', 'interval')
    cdt = jnp.bfloat16 if use_bf16_matmul else jnp.float32
    bpe = 2 if use_bf16_matmul else 4

    rnd = lambda v, m: ((v + m - 1) // m) * m
    # Lane-dense feature padding (exact: padded weights/bias/ce are zero).
    H0p, H1p, Op = rnd(H0, 128), rnd(H1, 128), rnd(O, 128)

    # Batch padding / sharding.  batch_block (multiple of 8) lets the leading
    # "parallel" grid axis shard the batch across v7x's two TensorCores.
    if batch_block is None:
        NP = max(8, rnd(N, 8))
        nb = NP
    else:
        nb = max(8, rnd(int(batch_block), 8))
        NP = max(nb, rnd(N, nb))
    n_shards = NP // nb

    # ---- time chunking: tc multiple of 8 (unless single chunk), bounded by a
    #      per-chunk VMEM budget; T is padded up instead of degrading to tc=1.
    def chunk_bytes(tc_):
        out_b = nb * Op * 4 if last_only else 2 * tc_ * nb * Op * 4
        return (2 * tc_ * nb * in_size * bpe          # x chunk (double buffered)
                + 2 * tc_ * (H0p + H1p) * 4           # ce chunks
                + tc_ * nb * H0p * 4                  # xproj_buf
                + tc_ * nb * H1p * bpe                # spk2_buf
                + out_b)

    tct = max(1, int(t_chunk))
    tc = T if T <= tct else max(8, (tct // 8) * 8)
    while tc > 8 and chunk_bytes(tc) > (16 << 20):
        tc -= 8
    if tc >= T:
        tc, n_chunks, T_pad = T, 1, T
    else:
        tc = max(8, (tc // 8) * 8)
        n_chunks = -(-T // tc)
        T_pad = n_chunks * tc
    tail = T - (n_chunks - 1) * tc                     # valid steps in last chunk
    buffer_spk2 = (not last_only) or (T_pad != T)

    # ---- host-side data prep (padding is all zeros => exact) ----
    x_seq = jnp.transpose(x, (2, 0, 1)).astype(cdt)                   # (T, N, in)
    x_seq = jnp.pad(x_seq, ((0, T_pad - T), (0, NP - N), (0, 0)))
    ce1 = jnp.pad(jnp.transpose(ce[:H0]).astype(jnp.float32),
                  ((0, T_pad - T), (0, H0p - H0)))                    # (T_pad, H0p)
    ce2 = jnp.pad(jnp.transpose(ce[:H1]).astype(jnp.float32),
                  ((0, T_pad - T), (0, H1p - H1)))                    # (T_pad, H1p)

    b1 = jnp.pad((bi1 + bh1).astype(jnp.float32), ((0, 0), (0, H0p - H0)))
    wi1_p = jnp.pad(wi1, ((0, 0), (0, H0p - H0))).astype(cdt)
    wi2_p = jnp.pad(wi2, ((0, H0p - H0), (0, H1p - H1)))
    wh1_p = jnp.pad(wh1, ((0, H0p - H0), (0, H0p - H0)))
    wcat = jnp.concatenate([wi2_p, wh1_p], axis=1).astype(cdt)        # (H0p, H1p+H0p)
    bi2_p = jnp.pad(bi2.astype(jnp.float32), ((0, 0), (0, H1p - H1)))
    wo_p = jnp.pad(wo, ((0, H1p - H1), (0, Op - O))).astype(cdt)
    bo_p = jnp.pad(bo.astype(jnp.float32), ((0, 0), (0, Op - O)))

    kernel = functools.partial(
        _tesnn_kernel, decay=float(decay), co2=float(beta), t_chunk=tc,
        h1p=H1p, tail=tail, last_only=last_only, buffer_spk2=buffer_spk2,
        compute_dtype=cdt)

    full_spec = lambda shp: pl.BlockSpec(shp, lambda b, c: (0, 0))

    if last_only:
        out_shape = jax.ShapeDtypeStruct((NP, Op), jnp.float32)
        out_spec = pl.BlockSpec((nb, Op), lambda b, c: (b, 0))
    else:
        out_shape = jax.ShapeDtypeStruct((T_pad, NP, Op), jnp.float32)
        out_spec = pl.BlockSpec((tc, nb, Op), lambda b, c: (c, b, 0))

    # VMEM budget estimate for the scoped limit (double-buffered I/O + scratch).
    w_bytes = ((in_size * H0p + H0p * (H1p + H0p) + H1p * Op) * bpe
               + (H0p + H1p + Op) * 4)
    scr_bytes = ((4 * nb * H0p + 3 * nb * H1p) * 4
                 + tc * nb * H0p * 4 + tc * nb * H1p * bpe)
    vmem_limit = int(min(64 << 20,
                         max(24 << 20, 2 * w_bytes + chunk_bytes(tc)
                             + scr_bytes + (4 << 20))))

    out = pl.pallas_call(
        kernel,
        out_shape=out_shape,
        grid_spec=pltpu.PrefetchScalarGridSpec(
            num_scalar_prefetch=0,
            grid=(n_shards, n_chunks),
            in_specs=[
                pl.BlockSpec((tc, nb, in_size), lambda b, c: (c, b, 0)),  # x chunk
                pl.BlockSpec((tc, H0p), lambda b, c: (c, 0)),             # ce1 chunk
                pl.BlockSpec((tc, H1p), lambda b, c: (c, 0)),             # ce2 chunk
                full_spec((in_size, H0p)),                                # Wi1
                full_spec((1, H0p)),                                      # bi1 + bh1
                full_spec((H0p, H1p + H0p)),                              # [Wi2 | Wh1]
                full_spec((1, H1p)),                                      # bi2
                full_spec((H1p, Op)),                                     # Wo
                full_spec((1, Op)),                                       # bo
            ],
            out_specs=out_spec,
            scratch_shapes=[
                pltpu.VMEM((nb, H0p), jnp.float32),       # mem1
                pltpu.VMEM((nb, H0p), jnp.float32),       # spike1
                pltpu.VMEM((nb, H0p), jnp.float32),       # thresh1
                pltpu.VMEM((nb, H0p), jnp.float32),       # rec1 = spk1 @ Wh1
                pltpu.VMEM((nb, H1p), jnp.float32),       # mem2
                pltpu.VMEM((nb, H1p), jnp.float32),       # spike2
                pltpu.VMEM((nb, H1p), jnp.float32),       # thresh2
                pltpu.VMEM((tc, nb, H0p), jnp.float32),   # chunk input projection
                pltpu.VMEM((tc, nb, H1p), cdt),           # chunk spike2 buffer
            ],
        ),
        compiler_params=pltpu.CompilerParams(
            dimension_semantics=("parallel", "arbitrary"),
            vmem_limit_bytes=vmem_limit,
        ),
    )(x_seq, ce1, ce2, wi1_p, b1, wcat, bi2_p, wo_p, bo_p)

    if last_only:
        return out[:N, :O]                                   # (N, O)
    out = out[:T, :N, :O]                                    # (T, N, O)
    return jnp.transpose(out, (1, 2, 0))                     # (N, O, T)


def tesnn_reference(x, params, *, decay=0.5, beta=0.02):
    """Pure-JAX reference of the PyTorch forward; returns full (N, O, T)."""
    N, in_size, T = x.shape
    wi1, bi1 = params['i2h_1']
    wh1, bh1 = params['h2h_1']
    wi2, bi2 = params['i2h_2']
    wo, bo = params['h2o_3']
    ce = params['ce']
    H0, H1 = wi1.shape[1], wi2.shape[1]

    mem1 = spk1 = jnp.zeros((N, H0), jnp.float32)
    mem2 = spk2 = jnp.zeros((N, H1), jnp.float32)
    th1 = jnp.full((N, H0), THRESH, jnp.float32)
    th2 = jnp.full((N, H1), THRESH, jnp.float32)
    outs = []
    for t in range(T):
        xt = x[:, :, t].astype(jnp.float32)
        h1 = xt @ wi1 + bi1 + spk1 @ wh1 + bh1
        th1 = th1 + mem1 * ce[:H0, t][None, :] - (th1 - THRESH) * beta
        mem1 = mem1 * decay * (1.0 - spk1) + h1
        spk1 = (mem1 > th1).astype(jnp.float32)
        h2 = spk1 @ wi2 + bi2
        th2 = th2 + mem2 * ce[:H1, t][None, :] - (th2 - THRESH) * beta
        mem2 = mem2 * decay * (1.0 - spk2) + h2
        spk2 = (mem2 > th2).astype(jnp.float32)
        outs.append(spk2 @ wo + bo)
    return jnp.stack(outs, axis=2)   # (N, O, T)


def init_params(key, in_size, hidden, out_size, T):
    """Deterministic init mirroring nn.Linear default + TE-N ce ~ N(0.01, 0.01)."""
    H0, H1 = hidden
    ks = jax.random.split(key, 9)

    def linear(kw, kb, fan_in, fan_out):
        bound = 1.0 / np.sqrt(fan_in)
        w = jax.random.uniform(kw, (fan_in, fan_out), jnp.float32, -bound, bound)
        b = jax.random.uniform(kb, (1, fan_out), jnp.float32, -bound, bound)
        return w, b

    return {
        'i2h_1': linear(ks[0], ks[1], in_size, H0),
        'h2h_1': linear(ks[2], ks[3], H0, H0),
        'i2h_2': linear(ks[4], ks[5], H0, H1),
        'h2o_3': linear(ks[6], ks[7], H1, out_size),
        'ce': 0.01 + 0.01 * jax.random.normal(ks[8], (H1, T), jnp.float32),  # TE-N
    }


if __name__ == "__main__":
    key = jax.random.PRNGKey(0)
    k_x, k_p, k_x2, k_p2, k_x3, k_p3 = jax.random.split(key, 6)

    N, IN, OUT = 2, 4, 4
    HIDDEN = [32, 32]

    # --- config 1: T=8 (single chunk), task='duration' and 'syn' ---
    T = 8
    x = jax.random.normal(k_x, (N, IN, T), jnp.float32)
    params = init_params(k_p, IN, HIDDEN, OUT, T)
    ref_full = tesnn_reference(x, params)

    out_dur = jax.block_until_ready(
        tesnn_forward(x, params, task='duration', t_chunk=8))
    np.testing.assert_allclose(np.asarray(out_dur), np.asarray(ref_full[:, :, -1]),
                               rtol=1e-5, atol=1e-5)
    out_syn = jax.block_until_ready(
        tesnn_forward(x, params, task='syn', t_chunk=8))
    np.testing.assert_allclose(np.asarray(out_syn), np.asarray(ref_full),
                               rtol=1e-5, atol=1e-5)

    # --- config 2: T=16 with t_chunk=8 (two chunks, state carried across grid) ---
    T2 = 16
    x2 = jax.random.normal(k_x2, (N, IN, T2), jnp.float32)
    params2 = init_params(k_p2, IN, HIDDEN, OUT, T2)
    ref2 = tesnn_reference(x2, params2)

    out2_dur = jax.block_until_ready(
        tesnn_forward(x2, params2, task='duration', t_chunk=8))
    np.testing.assert_allclose(np.asarray(out2_dur), np.asarray(ref2[:, :, -1]),
                               rtol=1e-5, atol=1e-5)
    out2_syn = jax.block_until_ready(
        tesnn_forward(x2, params2, task='syn', t_chunk=8))
    np.testing.assert_allclose(np.asarray(out2_syn), np.asarray(ref2),
                               rtol=1e-5, atol=1e-5)

    # --- config 3: N=16 split into 2 batch shards (parallel grid axis, exercises
    #     the v7x megacore path) and T=12 (non-multiple of the chunk -> padded
    #     time + static-tail readout) ---
    N3, T3 = 16, 12
    x3 = jax.random.normal(k_x3, (N3, IN, T3), jnp.float32)
    params3 = init_params(k_p3, IN, HIDDEN, OUT, T3)
    ref3 = tesnn_reference(x3, params3)

    out3_dur = jax.block_until_ready(
        tesnn_forward(x3, params3, task='duration', t_chunk=8, batch_block=8))
    np.testing.assert_allclose(np.asarray(out3_dur), np.asarray(ref3[:, :, -1]),
                               rtol=1e-5, atol=1e-5)
    out3_syn = jax.block_until_ready(
        tesnn_forward(x3, params3, task='syn', t_chunk=8, batch_block=8))
    np.testing.assert_allclose(np.asarray(out3_syn), np.asarray(ref3),
                               rtol=1e-5, atol=1e-5)

    # --- bf16 MXU-operand mode (v6e/v7x perf path): run & sanity-check only;
    #     the hard spike threshold makes bit-parity with the f32 reference
    #     ill-posed, so no strict assertion here.
    out_bf16 = jax.block_until_ready(
        tesnn_forward(x, params, task='duration', t_chunk=8, use_bf16_matmul=True))
    assert out_bf16.shape == (N, OUT) and bool(jnp.all(jnp.isfinite(out_bf16)))

    print("KERNEL_OK")
</pallas_src>

<mosaic_0001>
module attributes {stable_mosaic.version = 11 : i64} {
  func.func @_tesnn_kernel(%arg0: i32, %arg1: i32, %arg2: memref<8x8x4xf32, #tpu.memory_space<vmem>>, %arg3: memref<8x128xf32, #tpu.memory_space<vmem>>, %arg4: memref<8x128xf32, #tpu.memory_space<vmem>>, %arg5: memref<4x128xf32, #tpu.memory_space<vmem>>, %arg6: memref<1x128xf32, #tpu.memory_space<vmem>>, %arg7: memref<128x256xf32, #tpu.memory_space<vmem>>, %arg8: memref<1x128xf32, #tpu.memory_space<vmem>>, %arg9: memref<128x128xf32, #tpu.memory_space<vmem>>, %arg10: memref<1x128xf32, #tpu.memory_space<vmem>>, %arg11: memref<8x128xf32, #tpu.memory_space<vmem>>, %arg12: memref<8x128xf32, #tpu.memory_space<vmem>>, %arg13: memref<8x128xf32, #tpu.memory_space<vmem>>, %arg14: memref<8x128xf32, #tpu.memory_space<vmem>>, %arg15: memref<8x128xf32, #tpu.memory_space<vmem>>, %arg16: memref<8x128xf32, #tpu.memory_space<vmem>>, %arg17: memref<8x128xf32, #tpu.memory_space<vmem>>, %arg18: memref<8x128xf32, #tpu.memory_space<vmem>>, %arg19: memref<8x8x128xf32, #tpu.memory_space<vmem>>, %arg20: memref<8x8x128xf32, #tpu.memory_space<vmem>>) attributes {dimension_semantics = [#tpu.dimension_semantics<parallel>, #tpu.dimension_semantics<arbitrary>], iteration_bounds = array<i64: 1, 1>, scalar_prefetch = 0 : i64, scratch_operands = 9 : i64, tpu.core_type = #tpu.core_type<tc>, window_params = [{transform_indices = @transform_0, window_bounds = array<i64: 8, 8, 4>}, {transform_indices = @transform_1, window_bounds = array<i64: 8, 128>}, {transform_indices = @transform_2, window_bounds = array<i64: 8, 128>}, {pipeline_mode = #tpu.pipeline_mode<synchronous>, transform_indices = @transform_3, window_bounds = array<i64: 4, 128>}, {pipeline_mode = #tpu.pipeline_mode<synchronous>, transform_indices = @transform_4, window_bounds = array<i64: 1, 128>}, {pipeline_mode = #tpu.pipeline_mode<synchronous>, transform_indices = @transform_5, window_bounds = array<i64: 128, 256>}, {pipeline_mode = #tpu.pipeline_mode<synchronous>, transform_indices = @transform_6, window_bounds = array<i64: 1, 128>}, {pipeline_mode = #tpu.pipeline_mode<synchronous>, transform_indices = @transform_7, window_bounds = array<i64: 128, 128>}, {pipeline_mode = #tpu.pipeline_mode<synchronous>, transform_indices = @transform_8, window_bounds = array<i64: 1, 128>}, {transform_indices = @transform_9, window_bounds = array<i64: 8, 128>}]} {
    %c0_i32 = arith.constant 0 : i32
    %0 = arith.cmpi eq, %arg1, %c0_i32 : i32
    %1 = arith.extui %0 : i1 to i32
    %c0_i32_0 = arith.constant 0 : i32
    %2 = arith.cmpi ne, %1, %c0_i32_0 : i32
    scf.if %2 {
      %cst_149 = arith.constant 0.000000e+00 : f32
      %424 = vector.broadcast %cst_149 : f32 to vector<8x128xf32>
      %c0_150 = arith.constant 0 : index
      %c0_151 = arith.constant 0 : index
      %425 = vector.load %arg12[%c0_150, %c0_151] : memref<8x128xf32, #tpu.memory_space<vmem>>, vector<8x128xf32>
      tpu.vector_store %arg12[%c0_150, %c0_151], %424 {strides = array<i32>} : memref<8x128xf32, #tpu.memory_space<vmem>>, vector<8x128xf32>,
      %cst_152 = arith.constant 0.000000e+00 : f32
      %426 = vector.broadcast %cst_152 : f32 to vector<8x128xf32>
      %c0_153 = arith.constant 0 : index
      %c0_154 = arith.constant 0 : index
      %427 = vector.load %arg13[%c0_153, %c0_154] : memref<8x128xf32, #tpu.memory_space<vmem>>, vector<8x128xf32>
      tpu.vector_store %arg13[%c0_153, %c0_154], %426 {strides = array<i32>} : memref<8x128xf32, #tpu.memory_space<vmem>>, vector<8x128xf32>,
      %cst_155 = arith.constant 3.000000e-01 : f32
      %428 = vector.broadcast %cst_155 : f32 to vector<8x128xf32>
      %c0_156 = arith.constant 0 : index
      %c0_157 = arith.constant 0 : index
      %429 = vector.load %arg14[%c0_156, %c0_157] : memref<8x128xf32, #tpu.memory_space<vmem>>, vector<8x128xf32>
      tpu.vector_store %arg14[%c0_156, %c0_157], %428 {strides = array<i32>} : memref<8x128xf32, #tpu.memory_space<vmem>>, vector<8x128xf32>,
      %cst_158 = arith.constant 0.000000e+00 : f32
      %430 = vector.broadcast %cst_158 : f32 to vector<8x128xf32>
      %c0_159 = arith.constant 0 : index
      %c0_160 = arith.constant 0 : index
      %431 = vector.load %arg15[%c0_159, %c0_160] : memref<8x128xf32, #tpu.memory_space<vmem>>, vector<8x128xf32>
      tpu.vector_store %arg15[%c0_159, %c0_160], %430 {strides = array<i32>} : memref<8x128xf32, #tpu.memory_space<vmem>>, vector<8x128xf32>,
      %cst_161 = arith.constant 0.000000e+00 : f32
      %432 = vector.broadcast %cst_161 : f32 to vector<8x128xf32>
      %c0_162 = arith.constant 0 : index
      %c0_163 = arith.constant 0 : index
      %433 = vector.load %arg16[%c0_162, %c0_163] : memref<8x128xf32, #tpu.memory_space<vmem>>, vector<8x128xf32>
      tpu.vector_store %arg16[%c0_162, %c0_163], %432 {strides = array<i32>} : memref<8x128xf32, #tpu.memory_space<vmem>>, vector<8x128xf32>,
      %cst_164 = arith.constant 0.000000e+00 : f32
      %434 = vector.broadcast %cst_164 : f32 to vector<8x128xf32>
      %c0_165 = arith.constant 0 : index
      %c0_166 = arith.constant 0 : index
      %435 = vector.load %arg17[%c0_165, %c0_166] : memref<8x128xf32, #tpu.memory_space<vmem>>, vector<8x128xf32>
      tpu.vector_store %arg17[%c0_165, %c0_166], %434 {strides = array<i32>} : memref<8x128xf32, #tpu.memory_space<vmem>>, vector<8x128xf32>,
      %cst_167 = arith.constant 3.000000e-01 : f32
      %436 = vector.broadcast %cst_167 : f32 to vector<8x128xf32>
      %c0_168 = arith.constant 0 : index
      %c0_169 = arith.constant 0 : index
      %437 = vector.load %arg18[%c0_168, %c0_169] : memref<8x128xf32, #tpu.memory_space<vmem>>, vector<8x128xf32>
      tpu.vector_store %arg18[%c0_168, %c0_169], %436 {strides = array<i32>} : memref<8x128xf32, #tpu.memory_space<vmem>>, vector<8x128xf32>,
    } else {
    }
    %c0 = arith.constant 0 : index
    %c0_1 = arith.constant 0 : index
    %c0_2 = arith.constant 0 : index
    %3 = vector.load %arg2[%c0, %c0_1, %c0_2] : memref<8x8x4xf32, #tpu.memory_space<vmem>>, vector<8x8x4xf32>
    %4 = vector.shape_cast %3 : vector<8x8x4xf32> to vector<64x4xf32>
    %c0_3 = arith.constant 0 : index
    %c0_4 = arith.constant 0 : index
    %5 = vector.load %arg5[%c0_3, %c0_4] : memref<4x128xf32, #tpu.memory_space<vmem>>, vector<4x128xf32>
    %cst = arith.constant dense<0.000000e+00> : vector<64x128xf32>
    %6 = tpu.matmul %4, %5, %cst {dimension_numbers = #tpu.dot_dimension_numbers<[1], [0], [0], [1], [0, 0, 1, 1], [], []>} : vector<64x4xf32>, vector<4x128xf32>, vector<64x128xf32> -> vector<64x128xf32>
    %7 = vector.shape_cast %6 : vector<64x128xf32> to vector<8x8x128xf32>
    %c0_5 = arith.constant 0 : index
    %c0_6 = arith.constant 0 : index
    %8 = vector.load %arg6[%c0_5, %c0_6] : memref<1x128xf32, #tpu.memory_space<vmem>>, vector<1x128xf32>
    %9 = vector.shape_cast %8 : vector<1x128xf32> to vector<1x1x128xf32>
    %10 = vector.broadcast %9 : vector<1x1x128xf32> to vector<8x8x128xf32>
    %11 = arith.addf %7, %10 : vector<8x8x128xf32>
    %c0_7 = arith.constant 0 : index
    %c0_8 = arith.constant 0 : index
    %c0_9 = arith.constant 0 : index
    %12 = vector.load %arg19[%c0_7, %c0_8, %c0_9] : memref<8x8x128xf32, #tpu.memory_space<vmem>>, vector<8x8x128xf32>
    tpu.vector_store %arg19[%c0_7, %c0_8, %c0_9], %11 {strides = array<i32>} : memref<8x8x128xf32, #tpu.memory_space<vmem>>, vector<8x8x128xf32>,
    %c0_10 = arith.constant 0 : index
    %c0_11 = arith.constant 0 : index
    %13 = vector.load %arg7[%c0_10, %c0_11] : memref<128x256xf32, #tpu.memory_space<vmem>>, vector<128x256xf32>
    %c0_12 = arith.constant 0 : index
    %c0_13 = arith.constant 0 : index
    %14 = vector.load %arg8[%c0_12, %c0_13] : memref<1x128xf32, #tpu.memory_space<vmem>>, vector<1x128xf32>
    %c0_14 = arith.constant 0 : index
    %c0_15 = arith.constant 0 : index
    %15 = vector.load %arg12[%c0_14, %c0_15] : memref<8x128xf32, #tpu.memory_space<vmem>>, vector<8x128xf32>
    %c0_16 = arith.constant 0 : index
    %c0_17 = arith.constant 0 : index
    %16 = vector.load %arg13[%c0_16, %c0_17] : memref<8x128xf32, #tpu.memory_space<vmem>>, vector<8x128xf32>
    %c0_18 = arith.constant 0 : index
    %c0_19 = arith.constant 0 : index
    %17 = vector.load %arg14[%c0_18, %c0_19] : memref<8x128xf32, #tpu.memory_space<vmem>>, vector<8x128xf32>
    %c0_20 = arith.constant 0 : index
    %c0_21 = arith.constant 0 : index
    %18 = vector.load %arg15[%c0_20, %c0_21] : memref<8x128xf32, #tpu.memory_space<vmem>>, vector<8x128xf32>
    %c0_22 = arith.constant 0 : index
    %c0_23 = arith.constant 0 : index
    %19 = vector.load %arg16[%c0_22, %c0_23] : memref<8x128xf32, #tpu.memory_space<vmem>>, vector<8x128xf32>
    %c0_24 = arith.constant 0 : index
    %c0_25 = arith.constant 0 : index
    %20 = vector.load %arg17[%c0_24, %c0_25] : memref<8x128xf32, #tpu.memory_space<vmem>>, vector<8x128xf32>
    %c0_26 = arith.constant 0 : index
    %c0_27 = arith.constant 0 : index
    %21 = vector.load %arg18[%c0_26, %c0_27] : memref<8x128xf32, #tpu.memory_space<vmem>>, vector<8x128xf32>
    %c0_i32_28 = arith.constant 0 : i32
    %22 = arith.index_cast %c0_i32_28 : i32 to index
    %c0_29 = arith.constant 0 : index
    %23 = vector.load %arg3[%22, %c0_29] : memref<8x128xf32, #tpu.memory_space<vmem>>, vector<1x128xf32>
    %24 = arith.index_cast %c0_i32_28 : i32 to index
    %c0_30 = arith.constant 0 : index
    %25 = vector.load %arg4[%24, %c0_30] : memref<8x128xf32, #tpu.memory_space<vmem>>, vector<1x128xf32>
    %26 = arith.index_cast %c0_i32_28 : i32 to index
    %c0_31 = arith.constant 0 : index
    %c0_32 = arith.constant 0 : index
    %27 = vector.load %arg19[%26, %c0_31, %c0_32] : memref<8x8x128xf32, #tpu.memory_space<vmem>>, vector<1x8x128xf32>
    %28 = vector.shape_cast %27 : vector<1x8x128xf32> to vector<8x128xf32>
    %29 = arith.addf %28, %18 : vector<8x128xf32>
    %30 = vector.broadcast %23 : vector<1x128xf32> to vector<8x128xf32>
    %31 = arith.mulf %15, %30 : vector<8x128xf32>
    %32 = arith.addf %17, %31 : vector<8x128xf32>
    %cst_33 = arith.constant 3.000000e-01 : f32
    %33 = vector.broadcast %cst_33 : f32 to vector<8x128xf32>
    %34 = arith.subf %17, %33 : vector<8x128xf32>
    %cst_34 = arith.constant 2.000000e-02 : f32
    %35 = vector.broadcast %cst_34 : f32 to vector<8x128xf32>
    %36 = arith.mulf %34, %35 : vector<8x128xf32>
    %37 = arith.subf %32, %36 : vector<8x128xf32>
    %cst_35 = arith.constant 5.000000e-01 : f32
    %38 = vector.broadcast %cst_35 : f32 to vector<8x128xf32>
    %39 = arith.mulf %15, %38 : vector<8x128xf32>
    %cst_36 = arith.constant 1.000000e+00 : f32
    %40 = vector.broadcast %cst_36 : f32 to vector<8x128xf32>
    %41 = arith.subf %40, %16 : vector<8x128xf32>
    %42 = arith.mulf %39, %41 : vector<8x128xf32>
    %43 = arith.addf %42, %29 : vector<8x128xf32>
    %44 = arith.cmpf ogt, %43, %37 : vector<8x128xf32>
    %45 = arith.extui %44 : vector<8x128xi1> to vector<8x128xi32>
    %46 = arith.sitofp %45 : vector<8x128xi32> to vector<8x128xf32>
    %cst_37 = arith.constant dense<0.000000e+00> : vector<8x256xf32>
    %47 = tpu.matmul %46, %13, %cst_37 {dimension_numbers = #tpu.dot_dimension_numbers<[1], [0], [0], [1], [0, 0, 1, 1], [], []>} : vector<8x128xf32>, vector<128x256xf32>, vector<8x256xf32> -> vector<8x256xf32>
    %48 = vector.extract_strided_slice %47 {offsets = [0, 0], sizes = [8, 128], strides = [1, 1]} : vector<8x256xf32> to vector<8x128xf32>
    %49 = vector.broadcast %14 : vector<1x128xf32> to vector<8x128xf32>
    %50 = arith.addf %48, %49 : vector<8x128xf32>
    %51 = vector.extract_strided_slice %47 {offsets = [0, 128], sizes = [8, 128], strides = [1, 1]} : vector<8x256xf32> to vector<8x128xf32>
    %52 = vector.broadcast %25 : vector<1x128xf32> to vector<8x128xf32>
    %53 = arith.mulf %19, %52 : vector<8x128xf32>
    %54 = arith.addf %21, %53 : vector<8x128xf32>
    %cst_38 = arith.constant 3.000000e-01 : f32
    %55 = vector.broadcast %cst_38 : f32 to vector<8x128xf32>
    %56 = arith.subf %21, %55 : vector<8x128xf32>
    %cst_39 = arith.constant 2.000000e-02 : f32
    %57 = vector.broadcast %cst_39 : f32 to vector<8x128xf32>
    %58 = arith.mulf %56, %57 : vector<8x128xf32>
    %59 = arith.subf %54, %58 : vector<8x128xf32>
    %cst_40 = arith.constant 5.000000e-01 : f32
    %60 = vector.broadcast %cst_40 : f32 to vector<8x128xf32>
    %61 = arith.mulf %19, %60 : vector<8x128xf32>
    %cst_41 = arith.constant 1.000000e+00 : f32
    %62 = vector.broadcast %cst_41 : f32 to vector<8x128xf32>
    %63 = arith.subf %62, %20 : vector<8x128xf32>
    %64 = arith.mulf %61, %63 : vector<8x128xf32>
    %65 = arith.addf %64, %50 : vector<8x128xf32>
    %66 = arith.cmpf ogt, %65, %59 : vector<8x128xf32>
    %67 = arith.extui %44 : vector<8x128xi1> to vector<8x128xi32>
    %68 = arith.sitofp %67 : vector<8x128xi32> to vector<8x128xf32>
    %69 = arith.extui %66 : vector<8x128xi1> to vector<8x128xi32>
    %70 = arith.sitofp %69 : vector<8x128xi32> to vector<8x128xf32>
    %c1_i32 = arith.constant 1 : i32
    %71 = arith.index_cast %c1_i32 : i32 to index
    %c0_42 = arith.constant 0 : index
    %72 = vector.load %arg3[%71, %c0_42] : memref<8x128xf32, #tpu.memory_space<vmem>>, vector<1x128xf32>
    %73 = arith.index_cast %c1_i32 : i32 to index
    %c0_43 = arith.constant 0 : index
    %74 = vector.load %arg4[%73, %c0_43] : memref<8x128xf32, #tpu.memory_space<vmem>>, vector<1x128xf32>
    %75 = arith.index_cast %c1_i32 : i32 to index
    %c0_44 = arith.constant 0 : index
    %c0_45 = arith.constant 0 : index
    %76 = vector.load %arg19[%75, %c0_44, %c0_45] : memref<8x8x128xf32, #tpu.memory_space<vmem>>, vector<1x8x128xf32>
    %77 = vector.shape_cast %76 : vector<1x8x128xf32> to vector<8x128xf32>
    %78 = arith.addf %77, %51 : vector<8x128xf32>
    %79 = vector.broadcast %72 : vector<1x128xf32> to vector<8x128xf32>
    %80 = arith.mulf %43, %79 : vector<8x128xf32>
    %81 = arith.addf %37, %80 : vector<8x128xf32>
    %cst_46 = arith.constant 3.000000e-01 : f32
    %82 = vector.broadcast %cst_46 : f32 to vector<8x128xf32>
    %83 = arith.subf %37, %82 : vector<8x128xf32>
    %cst_47 = arith.constant 2.000000e-02 : f32
    %84 = vector.broadcast %cst_47 : f32 to vector<8x128xf32>
    %85 = arith.mulf %83, %84 : vector<8x128xf32>
    %86 = arith.subf %81, %85 : vector<8x128xf32>
    %cst_48 = arith.constant 5.000000e-01 : f32
    %87 = vector.broadcast %cst_48 : f32 to vector<8x128xf32>
    %88 = arith.mulf %43, %87 : vector<8x128xf32>
    %cst_49 = arith.constant 1.000000e+00 : f32
    %89 = vector.broadcast %cst_49 : f32 to vector<8x128xf32>
    %90 = arith.subf %89, %68 : vector<8x128xf32>
    %91 = arith.mulf %88, %90 : vector<8x128xf32>
    %92 = arith.addf %91, %78 : vector<8x128xf32>
    %93 = arith.cmpf ogt, %92, %86 : vector<8x128xf32>
    %94 = arith.extui %93 : vector<8x128xi1> to vector<8x128xi32>
    %95 = arith.sitofp %94 : vector<8x128xi32> to vector<8x128xf32>
    %cst_50 = arith.constant dense<0.000000e+00> : vector<8x256xf32>
    %96 = tpu.matmul %95, %13, %cst_50 {dimension_numbers = #tpu.dot_dimension_numbers<[1], [0], [0], [1], [0, 0, 1, 1], [], []>} : vector<8x128xf32>, vector<128x256xf32>, vector<8x256xf32> -> vector<8x256xf32>
    %97 = vector.extract_strided_slice %96 {offsets = [0, 0], sizes = [8, 128], strides = [1, 1]} : vector<8x256xf32> to vector<8x128xf32>
    %98 = vector.broadcast %14 : vector<1x128xf32> to vector<8x128xf32>
    %99 = arith.addf %97, %98 : vector<8x128xf32>
    %100 = vector.extract_strided_slice %96 {offsets = [0, 128], sizes = [8, 128], strides = [1, 1]} : vector<8x256xf32> to vector<8x128xf32>
    %101 = vector.broadcast %74 : vector<1x128xf32> to vector<8x128xf32>
    %102 = arith.mulf %65, %101 : vector<8x128xf32>
    %103 = arith.addf %59, %102 : vector<8x128xf32>
    %cst_51 = arith.constant 3.000000e-01 : f32
    %104 = vector.broadcast %cst_51 : f32 to vector<8x128xf32>
    %105 = arith.subf %59, %104 : vector<8x128xf32>
    %cst_52 = arith.constant 2.000000e-02 : f32
    %106 = vector.broadcast %cst_52 : f32 to vector<8x128xf32>
    %107 = arith.mulf %105, %106 : vector<8x128xf32>
    %108 = arith.subf %103, %107 : vector<8x128xf32>
    %cst_53 = arith.constant 5.000000e-01 : f32
    %109 = vector.broadcast %cst_53 : f32 to vector<8x128xf32>
    %110 = arith.mulf %65, %109 : vector<8x128xf32>
    %cst_54 = arith.constant 1.000000e+00 : f32
    %111 = vector.broadcast %cst_54 : f32 to vector<8x128xf32>
    %112 = arith.subf %111, %70 : vector<8x128xf32>
    %113 = arith.mulf %110, %112 : vector<8x128xf32>
    %114 = arith.addf %113, %99 : vector<8x128xf32>
    %115 = arith.cmpf ogt, %114, %108 : vector<8x128xf32>
    %116 = arith.extui %93 : vector<8x128xi1> to vector<8x128xi32>
    %117 = arith.sitofp %116 : vector<8x128xi32> to vector<8x128xf32>
    %118 = arith.extui %115 : vector<8x128xi1> to vector<8x128xi32>
    %119 = arith.sitofp %118 : vector<8x128xi32> to vector<8x128xf32>
    %c2_i32 = arith.constant 2 : i32
    %120 = arith.index_cast %c2_i32 : i32 to index
    %c0_55 = arith.constant 0 : index
    %121 = vector.load %arg3[%120, %c0_55] : memref<8x128xf32, #tpu.memory_space<vmem>>, vector<1x128xf32>
    %122 = arith.index_cast %c2_i32 : i32 to index
    %c0_56 = arith.constant 0 : index
    %123 = vector.load %arg4[%122, %c0_56] : memref<8x128xf32, #tpu.memory_space<vmem>>, vector<1x128xf32>
    %124 = arith.index_cast %c2_i32 : i32 to index
    %c0_57 = arith.constant 0 : index
    %c0_58 = arith.constant 0 : index
    %125 = vector.load %arg19[%124, %c0_57, %c0_58] : memref<8x8x128xf32, #tpu.memory_space<vmem>>, vector<1x8x128xf32>
    %126 = vector.shape_cast %125 : vector<1x8x128xf32> to vector<8x128xf32>
    %127 = arith.addf %126, %100 : vector<8x128xf32>
    %128 = vector.broadcast %121 : vector<1x128xf32> to vector<8x128xf32>
    %129 = arith.mulf %92, %128 : vector<8x128xf32>
    %130 = arith.addf %86, %129 : vector<8x128xf32>
    %cst_59 = arith.constant 3.000000e-01 : f32
    %131 = vector.broadcast %cst_59 : f32 to vector<8x128xf32>
    %132 = arith.subf %86, %131 : vector<8x128xf32>
    %cst_60 = arith.constant 2.000000e-02 : f32
    %133 = vector.broadcast %cst_60 : f32 to vector<8x128xf32>
    %134 = arith.mulf %132, %133 : vector<8x128xf32>
    %135 = arith.subf %130, %134 : vector<8x128xf32>
    %cst_61 = arith.constant 5.000000e-01 : f32
    %136 = vector.broadcast %cst_61 : f32 to vector<8x128xf32>
    %137 = arith.mulf %92, %136 : vector<8x128xf32>
    %cst_62 = arith.constant 1.000000e+00 : f32
    %138 = vector.broadcast %cst_62 : f32 to vector<8x128xf32>
    %139 = arith.subf %138, %117 : vector<8x128xf32>
    %140 = arith.mulf %137, %139 : vector<8x128xf32>
    %141 = arith.addf %140, %127 : vector<8x128xf32>
    %142 = arith.cmpf ogt, %141, %135 : vector<8x128xf32>
    %143 = arith.extui %142 : vector<8x128xi1> to vector<8x128xi32>
    %144 = arith.sitofp %143 : vector<8x128xi32> to vector<8x128xf32>
    %cst_63 = arith.constant dense<0.000000e+00> : vector<8x256xf32>
    %145 = tpu.matmul %144, %13, %cst_63 {dimension_numbers = #tpu.dot_dimension_numbers<[1], [0], [0], [1], [0, 0, 1, 1], [], []>} : vector<8x128xf32>, vector<128x256xf32>, vector<8x256xf32> -> vector<8x256xf32>
    %146 = vector.extract_strided_slice %145 {offsets = [0, 0], sizes = [8, 128], strides = [1, 1]} : vector<8x256xf32> to vector<8x128xf32>
    %147 = vector.broadcast %14 : vector<1x128xf32> to vector<8x128xf32>
    %148 = arith.addf %146, %147 : vector<8x128xf32>
    %149 = vector.extract_strided_slice %145 {offsets = [0, 128], sizes = [8, 128], strides = [1, 1]} : vector<8x256xf32> to vector<8x128xf32>
    %150 = vector.broadcast %123 : vector<1x128xf32> to vector<8x128xf32>
    %151 = arith.mulf %114, %150 : vector<8x128xf32>
    %152 = arith.addf %108, %151 : vector<8x128xf32>
    %cst_64 = arith.constant 3.000000e-01 : f32
    %153 = vector.broadcast %cst_64 : f32 to vector<8x128xf32>
    %154 = arith.subf %108, %153 : vector<8x128xf32>
    %cst_65 = arith.constant 2.000000e-02 : f32
    %155 = vector.broadcast %cst_65 : f32 to vector<8x128xf32>
    %156 = arith.mulf %154, %155 : vector<8x128xf32>
    %157 = arith.subf %152, %156 : vector<8x128xf32>
    %cst_66 = arith.constant 5.000000e-01 : f32
    %158 = vector.broadcast %cst_66 : f32 to vector<8x128xf32>
    %159 = arith.mulf %114, %158 : vector<8x128xf32>
    %cst_67 = arith.constant 1.000000e+00 : f32
    %160 = vector.broadcast %cst_67 : f32 to vector<8x128xf32>
    %161 = arith.subf %160, %119 : vector<8x128xf32>
    %162 = arith.mulf %159, %161 : vector<8x128xf32>
    %163 = arith.addf %162, %148 : vector<8x128xf32>
    %164 = arith.cmpf ogt, %163, %157 : vector<8x128xf32>
    %165 = arith.extui %142 : vector<8x128xi1> to vector<8x128xi32>
    %166 = arith.sitofp %165 : vector<8x128xi32> to vector<8x128xf32>
    %167 = arith.extui %164 : vector<8x128xi1> to vector<8x128xi32>
    %168 = arith.sitofp %167 : vector<8x128xi32> to vector<8x128xf32>
    %c3_i32 = arith.constant 3 : i32
    %169 = arith.index_cast %c3_i32 : i32 to index
    %c0_68 = arith.constant 0 : index
    %170 = vector.load %arg3[%169, %c0_68] : memref<8x128xf32, #tpu.memory_space<vmem>>, vector<1x128xf32>
    %171 = arith.index_cast %c3_i32 : i32 to index
    %c0_69 = arith.constant 0 : index
    %172 = vector.load %arg4[%171, %c0_69] : memref<8x128xf32, #tpu.memory_space<vmem>>, vector<1x128xf32>
    %173 = arith.index_cast %c3_i32 : i32 to index
    %c0_70 = arith.constant 0 : index
    %c0_71 = arith.constant 0 : index
    %174 = vector.load %arg19[%173, %c0_70, %c0_71] : memref<8x8x128xf32, #tpu.memory_space<vmem>>, vector<1x8x128xf32>
    %175 = vector.shape_cast %174 : vector<1x8x128xf32> to vector<8x128xf32>
    %176 = arith.addf %175, %149 : vector<8x128xf32>
    %177 = vector.broadcast %170 : vector<1x128xf32> to vector<8x128xf32>
    %178 = arith.mulf %141, %177 : vector<8x128xf32>
    %179 = arith.addf %135, %178 : vector<8x128xf32>
    %cst_72 = arith.constant 3.000000e-01 : f32
    %180 = vector.broadcast %cst_72 : f32 to vector<8x128xf32>
    %181 = arith.subf %135, %180 : vector<8x128xf32>
    %cst_73 = arith.constant 2.000000e-02 : f32
    %182 = vector.broadcast %cst_73 : f32 to vector<8x128xf32>
    %183 = arith.mulf %181, %182 : vector<8x128xf32>
    %184 = arith.subf %179, %183 : vector<8x128xf32>
    %cst_74 = arith.constant 5.000000e-01 : f32
    %185 = vector.broadcast %cst_74 : f32 to vector<8x128xf32>
    %186 = arith.mulf %141, %185 : vector<8x128xf32>
    %cst_75 = arith.constant 1.000000e+00 : f32
    %187 = vector.broadcast %cst_75 : f32 to vector<8x128xf32>
    %188 = arith.subf %187, %166 : vector<8x128xf32>
    %189 = arith.mulf %186, %188 : vector<8x128xf32>
    %190 = arith.addf %189, %176 : vector<8x128xf32>
    %191 = arith.cmpf ogt, %190, %184 : vector<8x128xf32>
    %192 = arith.extui %191 : vector<8x128xi1> to vector<8x128xi32>
    %193 = arith.sitofp %192 : vector<8x128xi32> to vector<8x128xf32>
    %cst_76 = arith.constant dense<0.000000e+00> : vector<8x256xf32>
    %194 = tpu.matmul %193, %13, %cst_76 {dimension_numbers = #tpu.dot_dimension_numbers<[1], [0], [0], [1], [0, 0, 1, 1], [], []>} : vector<8x128xf32>, vector<128x256xf32>, vector<8x256xf32> -> vector<8x256xf32>
    %195 = vector.extract_strided_slice %194 {offsets = [0, 0], sizes = [8, 128], strides = [1, 1]} : vector<8x256xf32> to vector<8x128xf32>
    %196 = vector.broadcast %14 : vector<1x128xf32> to vector<8x128xf32>
    %197 = arith.addf %195, %196 : vector<8x128xf32>
    %198 = vector.extract_strided_slice %194 {offsets = [0, 128], sizes = [8, 128], strides = [1, 1]} : vector<8x256xf32> to vector<8x128xf32>
    %199 = vector.broadcast %172 : vector<1x128xf32> to vector<8x128xf32>
    %200 = arith.mulf %163, %199 : vector<8x128xf32>
    %201 = arith.addf %157, %200 : vector<8x128xf32>
    %cst_77 = arith.constant 3.000000e-01 : f32
    %202 = vector.broadcast %cst_77 : f32 to vector<8x128xf32>
    %203 = arith.subf %157, %202 : vector<8x128xf32>
    %cst_78 = arith.constant 2.000000e-02 : f32
    %204 = vector.broadcast %cst_78 : f32 to vector<8x128xf32>
    %205 = arith.mulf %203, %204 : vector<8x128xf32>
    %206 = arith.subf %201, %205 : vector<8x128xf32>
    %cst_79 = arith.constant 5.000000e-01 : f32
    %207 = vector.broadcast %cst_79 : f32 to vector<8x128xf32>
    %208 = arith.mulf %163, %207 : vector<8x128xf32>
    %cst_80 = arith.constant 1.000000e+00 : f32
    %209 = vector.broadcast %cst_80 : f32 to vector<8x128xf32>
    %210 = arith.subf %209, %168 : vector<8x128xf32>
    %211 = arith.mulf %208, %210 : vector<8x128xf32>
    %212 = arith.addf %211, %197 : vector<8x128xf32>
    %213 = arith.cmpf ogt, %212, %206 : vector<8x128xf32>
    %214 = arith.extui %191 : vector<8x128xi1> to vector<8x128xi32>
    %215 = arith.sitofp %214 : vector<8x128xi32> to vector<8x128xf32>
    %216 = arith.extui %213 : vector<8x128xi1> to vector<8x128xi32>
    %217 = arith.sitofp %216 : vector<8x128xi32> to vector<8x128xf32>
    %c4_i32 = arith.constant 4 : i32
    %218 = arith.index_cast %c4_i32 : i32 to index
    %c0_81 = arith.constant 0 : index
    %219 = vector.load %arg3[%218, %c0_81] : memref<8x128xf32, #tpu.memory_space<vmem>>, vector<1x128xf32>
    %220 = arith.index_cast %c4_i32 : i32 to index
    %c0_82 = arith.constant 0 : index
    %221 = vector.load %arg4[%220, %c0_82] : memref<8x128xf32, #tpu.memory_space<vmem>>, vector<1x128xf32>
    %222 = arith.index_cast %c4_i32 : i32 to index
    %c0_83 = arith.constant 0 : index
    %c0_84 = arith.constant 0 : index
    %223 = vector.load %arg19[%222, %c0_83, %c0_84] : memref<8x8x128xf32, #tpu.memory_space<vmem>>, vector<1x8x128xf32>
    %224 = vector.shape_cast %223 : vector<1x8x128xf32> to vector<8x128xf32>
    %225 = arith.addf %224, %198 : vector<8x128xf32>
    %226 = vector.broadcast %219 : vector<1x128xf32> to vector<8x128xf32>
    %227 = arith.mulf %190, %226 : vector<8x128xf32>
    %228 = arith.addf %184, %227 : vector<8x128xf32>
    %cst_85 = arith.constant 3.000000e-01 : f32
    %229 = vector.broadcast %cst_85 : f32 to vector<8x128xf32>
    %230 = arith.subf %184, %229 : vector<8x128xf32>
    %cst_86 = arith.constant 2.000000e-02 : f32
    %231 = vector.broadcast %cst_86 : f32 to vector<8x128xf32>
    %232 = arith.mulf %230, %231 : vector<8x128xf32>
    %233 = arith.subf %228, %232 : vector<8x128xf32>
    %cst_87 = arith.constant 5.000000e-01 : f32
    %234 = vector.broadcast %cst_87 : f32 to vector<8x128xf32>
    %235 = arith.mulf %190, %234 : vector<8x128xf32>
    %cst_88 = arith.constant 1.000000e+00 : f32
    %236 = vector.broadcast %cst_88 : f32 to vector<8x128xf32>
    %237 = arith.subf %236, %215 : vector<8x128xf32>
    %238 = arith.mulf %235, %237 : vector<8x128xf32>
    %239 = arith.addf %238, %225 : vector<8x128xf32>
    %240 = arith.cmpf ogt, %239, %233 : vector<8x128xf32>
    %241 = arith.extui %240 : vector<8x128xi1> to vector<8x128xi32>
    %242 = arith.sitofp %241 : vector<8x128xi32> to vector<8x128xf32>
    %cst_89 = arith.constant dense<0.000000e+00> : vector<8x256xf32>
    %243 = tpu.matmul %242, %13, %cst_89 {dimension_numbers = #tpu.dot_dimension_numbers<[1], [0], [0], [1], [0, 0, 1, 1], [], []>} : vector<8x128xf32>, vector<128x256xf32>, vector<8x256xf32> -> vector<8x256xf32>
    %244 = vector.extract_strided_slice %243 {offsets = [0, 0], sizes = [8, 128], strides = [1, 1]} : vector<8x256xf32> to vector<8x128xf32>
    %245 = vector.broadcast %14 : vector<1x128xf32> to vector<8x128xf32>
    %246 = arith.addf %244, %245 : vector<8x128xf32>
    %247 = vector.extract_strided_slice %243 {offsets = [0, 128], sizes = [8, 128], strides = [1, 1]} : vector<8x256xf32> to vector<8x128xf32>
    %248 = vector.broadcast %221 : vector<1x128xf32> to vector<8x128xf32>
    %249 = arith.mulf %212, %248 : vector<8x128xf32>
    %250 = arith.addf %206, %249 : vector<8x128xf32>
    %cst_90 = arith.constant 3.000000e-01 : f32
    %251 = vector.broadcast %cst_90 : f32 to vector<8x128xf32>
    %252 = arith.subf %206, %251 : vector<8x128xf32>
    %cst_91 = arith.constant 2.000000e-02 : f32
    %253 = vector.broadcast %cst_91 : f32 to vector<8x128xf32>
    %254 = arith.mulf %252, %253 : vector<8x128xf32>
    %255 = arith.subf %250, %254 : vector<8x128xf32>
    %cst_92 = arith.constant 5.000000e-01 : f32
    %256 = vector.broadcast %cst_92 : f32 to vector<8x128xf32>
    %257 = arith.mulf %212, %256 : vector<8x128xf32>
    %cst_93 = arith.constant 1.000000e+00 : f32
    %258 = vector.broadcast %cst_93 : f32 to vector<8x128xf32>
    %259 = arith.subf %258, %217 : vector<8x128xf32>
    %260 = arith.mulf %257, %259 : vector<8x128xf32>
    %261 = arith.addf %260, %246 : vector<8x128xf32>
    %262 = arith.cmpf ogt, %261, %255 : vector<8x128xf32>
    %263 = arith.extui %240 : vector<8x128xi1> to vector<8x128xi32>
    %264 = arith.sitofp %263 : vector<8x128xi32> to vector<8x128xf32>
    %265 = arith.extui %262 : vector<8x128xi1> to vector<8x128xi32>
    %266 = arith.sitofp %265 : vector<8x128xi32> to vector<8x128xf32>
    %c5_i32 = arith.constant 5 : i32
    %267 = arith.index_cast %c5_i32 : i32 to index
    %c0_94 = arith.constant 0 : index
    %268 = vector.load %arg3[%267, %c0_94] : memref<8x128xf32, #tpu.memory_space<vmem>>, vector<1x128xf32>
    %269 = arith.index_cast %c5_i32 : i32 to index
    %c0_95 = arith.constant 0 : index
    %270 = vector.load %arg4[%269, %c0_95] : memref<8x128xf32, #tpu.memory_space<vmem>>, vector<1x128xf32>
    %271 = arith.index_cast %c5_i32 : i32 to index
    %c0_96 = arith.constant 0 : index
    %c0_97 = arith.constant 0 : index
    %272 = vector.load %arg19[%271, %c0_96, %c0_97] : memref<8x8x128xf32, #tpu.memory_space<vmem>>, vector<1x8x128xf32>
    %273 = vector.shape_cast %272 : vector<1x8x128xf32> to vector<8x128xf32>
    %274 = arith.addf %273, %247 : vector<8x128xf32>
    %275 = vector.broadcast %268 : vector<1x128xf32> to vector<8x128xf32>
    %276 = arith.mulf %239, %275 : vector<8x128xf32>
    %277 = arith.addf %233, %276 : vector<8x128xf32>
    %cst_98 = arith.constant 3.000000e-01 : f32
    %278 = vector.broadcast %cst_98 : f32 to vector<8x128xf32>
    %279 = arith.subf %233, %278 : vector<8x128xf32>
    %cst_99 = arith.constant 2.000000e-02 : f32
    %280 = vector.broadcast %cst_99 : f32 to vector<8x128xf32>
    %281 = arith.mulf %279, %280 : vector<8x128xf32>
    %282 = arith.subf %277, %281 : vector<8x128xf32>
    %cst_100 = arith.constant 5.000000e-01 : f32
    %283 = vector.broadcast %cst_100 : f32 to vector<8x128xf32>
    %284 = arith.mulf %239, %283 : vector<8x128xf32>
    %cst_101 = arith.constant 1.000000e+00 : f32
    %285 = vector.broadcast %cst_101 : f32 to vector<8x128xf32>
    %286 = arith.subf %285, %264 : vector<8x128xf32>
    %287 = arith.mulf %284, %286 : vector<8x128xf32>
    %288 = arith.addf %287, %274 : vector<8x128xf32>
    %289 = arith.cmpf ogt, %288, %282 : vector<8x128xf32>
    %290 = arith.extui %289 : vector<8x128xi1> to vector<8x128xi32>
    %291 = arith.sitofp %290 : vector<8x128xi32> to vector<8x128xf32>
    %cst_102 = arith.constant dense<0.000000e+00> : vector<8x256xf32>
    %292 = tpu.matmul %291, %13, %cst_102 {dimension_numbers = #tpu.dot_dimension_numbers<[1], [0], [0], [1], [0, 0, 1, 1], [], []>} : vector<8x128xf32>, vector<128x256xf32>, vector<8x256xf32> -> vector<8x256xf32>
    %293 = vector.extract_strided_slice %292 {offsets = [0, 0], sizes = [8, 128], strides = [1, 1]} : vector<8x256xf32> to vector<8x128xf32>
    %294 = vector.broadcast %14 : vector<1x128xf32> to vector<8x128xf32>
    %295 = arith.addf %293, %294 : vector<8x128xf32>
    %296 = vector.extract_strided_slice %292 {offsets = [0, 128], sizes = [8, 128], strides = [1, 1]} : vector<8x256xf32> to vector<8x128xf32>
    %297 = vector.broadcast %270 : vector<1x128xf32> to vector<8x128xf32>
    %298 = arith.mulf %261, %297 : vector<8x128xf32>
    %299 = arith.addf %255, %298 : vector<8x128xf32>
    %cst_103 = arith.constant 3.000000e-01 : f32
    %300 = vector.broadcast %cst_103 : f32 to vector<8x128xf32>
    %301 = arith.subf %255, %300 : vector<8x128xf32>
    %cst_104 = arith.constant 2.000000e-02 : f32
    %302 = vector.broadcast %cst_104 : f32 to vector<8x128xf32>
    %303 = arith.mulf %301, %302 : vector<8x128xf32>
    %304 = arith.subf %299, %303 : vector<8x128xf32>
    %cst_105 = arith.constant 5.000000e-01 : f32
    %305 = vector.broadcast %cst_105 : f32 to vector<8x128xf32>
    %306 = arith.mulf %261, %305 : vector<8x128xf32>
    %cst_106 = arith.constant 1.000000e+00 : f32
    %307 = vector.broadcast %cst_106 : f32 to vector<8x128xf32>
    %308 = arith.subf %307, %266 : vector<8x128xf32>
    %309 = arith.mulf %306, %308 : vector<8x128xf32>
    %310 = arith.addf %309, %295 : vector<8x128xf32>
    %311 = arith.cmpf ogt, %310, %304 : vector<8x128xf32>
    %312 = arith.extui %289 : vector<8x128xi1> to vector<8x128xi32>
    %313 = arith.sitofp %312 : vector<8x128xi32> to vector<8x128xf32>
    %314 = arith.extui %311 : vector<8x128xi1> to vector<8x128xi32>
    %315 = arith.sitofp %314 : vector<8x128xi32> to vector<8x128xf32>
    %c6_i32 = arith.constant 6 : i32
    %316 = arith.index_cast %c6_i32 : i32 to index
    %c0_107 = arith.constant 0 : index
    %317 = vector.load %arg3[%316, %c0_107] : memref<8x128xf32, #tpu.memory_space<vmem>>, vector<1x128xf32>
    %318 = arith.index_cast %c6_i32 : i32 to index
    %c0_108 = arith.constant 0 : index
    %319 = vector.load %arg4[%318, %c0_108] : memref<8x128xf32, #tpu.memory_space<vmem>>, vector<1x128xf32>
    %320 = arith.index_cast %c6_i32 : i32 to index
    %c0_109 = arith.constant 0 : index
    %c0_110 = arith.constant 0 : index
    %321 = vector.load %arg19[%320, %c0_109, %c0_110] : memref<8x8x128xf32, #tpu.memory_space<vmem>>, vector<1x8x128xf32>
    %322 = vector.shape_cast %321 : vector<1x8x128xf32> to vector<8x128xf32>
    %323 = arith.addf %322, %296 : vector<8x128xf32>
    %324 = vector.broadcast %317 : vector<1x128xf32> to vector<8x128xf32>
    %325 = arith.mulf %288, %324 : vector<8x128xf32>
    %326 = arith.addf %282, %325 : vector<8x128xf32>
    %cst_111 = arith.constant 3.000000e-01 : f32
    %327 = vector.broadcast %cst_111 : f32 to vector<8x128xf32>
    %328 = arith.subf %282, %327 : vector<8x128xf32>
    %cst_112 = arith.constant 2.000000e-02 : f32
    %329 = vector.broadcast %cst_112 : f32 to vector<8x128xf32>
    %330 = arith.mulf %328, %329 : vector<8x128xf32>
    %331 = arith.subf %326, %330 : vector<8x128xf32>
    %cst_113 = arith.constant 5.000000e-01 : f32
    %332 = vector.broadcast %cst_113 : f32 to vector<8x128xf32>
    %333 = arith.mulf %288, %332 : vector<8x128xf32>
    %cst_114 = arith.constant 1.000000e+00 : f32
    %334 = vector.broadcast %cst_114 : f32 to vector<8x128xf32>
    %335 = arith.subf %334, %313 : vector<8x128xf32>
    %336 = arith.mulf %333, %335 : vector<8x128xf32>
    %337 = arith.addf %336, %323 : vector<8x128xf32>
    %338 = arith.cmpf ogt, %337, %331 : vector<8x128xf32>
    %339 = arith.extui %338 : vector<8x128xi1> to vector<8x128xi32>
    %340 = arith.sitofp %339 : vector<8x128xi32> to vector<8x128xf32>
    %cst_115 = arith.constant dense<0.000000e+00> : vector<8x256xf32>
    %341 = tpu.matmul %340, %13, %cst_115 {dimension_numbers = #tpu.dot_dimension_numbers<[1], [0], [0], [1], [0, 0, 1, 1], [], []>} : vector<8x128xf32>, vector<128x256xf32>, vector<8x256xf32> -> vector<8x256xf32>
    %342 = vector.extract_strided_slice %341 {offsets = [0, 0], sizes = [8, 128], strides = [1, 1]} : vector<8x256xf32> to vector<8x128xf32>
    %343 = vector.broadcast %14 : vector<1x128xf32> to vector<8x128xf32>
    %344 = arith.addf %342, %343 : vector<8x128xf32>
    %345 = vector.extract_strided_slice %341 {offsets = [0, 128], sizes = [8, 128], strides = [1, 1]} : vector<8x256xf32> to vector<8x128xf32>
    %346 = vector.broadcast %319 : vector<1x128xf32> to vector<8x128xf32>
    %347 = arith.mulf %310, %346 : vector<8x128xf32>
    %348 = arith.addf %304, %347 : vector<8x128xf32>
    %cst_116 = arith.constant 3.000000e-01 : f32
    %349 = vector.broadcast %cst_116 : f32 to vector<8x128xf32>
    %350 = arith.subf %304, %349 : vector<8x128xf32>
    %cst_117 = arith.constant 2.000000e-02 : f32
    %351 = vector.broadcast %cst_117 : f32 to vector<8x128xf32>
    %352 = arith.mulf %350, %351 : vector<8x128xf32>
    %353 = arith.subf %348, %352 : vector<8x128xf32>
    %cst_118 = arith.constant 5.000000e-01 : f32
    %354 = vector.broadcast %cst_118 : f32 to vector<8x128xf32>
    %355 = arith.mulf %310, %354 : vector<8x128xf32>
    %cst_119 = arith.constant 1.000000e+00 : f32
    %356 = vector.broadcast %cst_119 : f32 to vector<8x128xf32>
    %357 = arith.subf %356, %315 : vector<8x128xf32>
    %358 = arith.mulf %355, %357 : vector<8x128xf32>
    %359 = arith.addf %358, %344 : vector<8x128xf32>
    %360 = arith.cmpf ogt, %359, %353 : vector<8x128xf32>
    %361 = arith.extui %338 : vector<8x128xi1> to vector<8x128xi32>
    %362 = arith.sitofp %361 : vector<8x128xi32> to vector<8x128xf32>
    %363 = arith.extui %360 : vector<8x128xi1> to vector<8x128xi32>
    %364 = arith.sitofp %363 : vector<8x128xi32> to vector<8x128xf32>
    %c7_i32 = arith.constant 7 : i32
    %365 = arith.index_cast %c7_i32 : i32 to index
    %c0_120 = arith.constant 0 : index
    %366 = vector.load %arg3[%365, %c0_120] : memref<8x128xf32, #tpu.memory_space<vmem>>, vector<1x128xf32>
    %367 = arith.index_cast %c7_i32 : i32 to index
    %c0_121 = arith.constant 0 : index
    %368 = vector.load %arg4[%367, %c0_121] : memref<8x128xf32, #tpu.memory_space<vmem>>, vector<1x128xf32>
    %369 = arith.index_cast %c7_i32 : i32 to index
    %c0_122 = arith.constant 0 : index
    %c0_123 = arith.constant 0 : index
    %370 = vector.load %arg19[%369, %c0_122, %c0_123] : memref<8x8x128xf32, #tpu.memory_space<vmem>>, vector<1x8x128xf32>
    %371 = vector.shape_cast %370 : vector<1x8x128xf32> to vector<8x128xf32>
    %372 = arith.addf %371, %345 : vector<8x128xf32>
    %373 = vector.broadcast %366 : vector<1x128xf32> to vector<8x128xf32>
    %374 = arith.mulf %337, %373 : vector<8x128xf32>
    %375 = arith.addf %331, %374 : vector<8x128xf32>
    %cst_124 = arith.constant 3.000000e-01 : f32
    %376 = vector.broadcast %cst_124 : f32 to vector<8x128xf32>
    %377 = arith.subf %331, %376 : vector<8x128xf32>
    %cst_125 = arith.constant 2.000000e-02 : f32
    %378 = vector.broadcast %cst_125 : f32 to vector<8x128xf32>
    %379 = arith.mulf %377, %378 : vector<8x128xf32>
    %380 = arith.subf %375, %379 : vector<8x128xf32>
    %cst_126 = arith.constant 5.000000e-01 : f32
    %381 = vector.broadcast %cst_126 : f32 to vector<8x128xf32>
    %382 = arith.mulf %337, %381 : vector<8x128xf32>
    %cst_127 = arith.constant 1.000000e+00 : f32
    %383 = vector.broadcast %cst_127 : f32 to vector<8x128xf32>
    %384 = arith.subf %383, %362 : vector<8x128xf32>
    %385 = arith.mulf %382, %384 : vector<8x128xf32>
    %386 = arith.addf %385, %372 : vector<8x128xf32>
    %387 = arith.cmpf ogt, %386, %380 : vector<8x128xf32>
    %388 = arith.extui %387 : vector<8x128xi1> to vector<8x128xi32>
    %389 = arith.sitofp %388 : vector<8x128xi32> to vector<8x128xf32>
    %cst_128 = arith.constant dense<0.000000e+00> : vector<8x256xf32>
    %390 = tpu.matmul %389, %13, %cst_128 {dimension_numbers = #tpu.dot_dimension_numbers<[1], [0], [0], [1], [0, 0, 1, 1], [], []>} : vector<8x128xf32>, vector<128x256xf32>, vector<8x256xf32> -> vector<8x256xf32>
    %391 = vector.extract_strided_slice %390 {offsets = [0, 0], sizes = [8, 128], strides = [1, 1]} : vector<8x256xf32> to vector<8x128xf32>
    %392 = vector.broadcast %14 : vector<1x128xf32> to vector<8x128xf32>
    %393 = arith.addf %391, %392 : vector<8x128xf32>
    %394 = vector.extract_strided_slice %390 {offsets = [0, 128], sizes = [8, 128], strides = [1, 1]} : vector<8x256xf32> to vector<8x128xf32>
    %395 = vector.broadcast %368 : vector<1x128xf32> to vector<8x128xf32>
    %396 = arith.mulf %359, %395 : vector<8x128xf32>
    %397 = arith.addf %353, %396 : vector<8x128xf32>
    %cst_129 = arith.constant 3.000000e-01 : f32
    %398 = vector.broadcast %cst_129 : f32 to vector<8x128xf32>
    %399 = arith.subf %353, %398 : vector<8x128xf32>
    %cst_130 = arith.constant 2.000000e-02 : f32
    %400 = vector.broadcast %cst_130 : f32 to vector<8x128xf32>
    %401 = arith.mulf %399, %400 : vector<8x128xf32>
    %402 = arith.subf %397, %401 : vector<8x128xf32>
    %cst_131 = arith.constant 5.000000e-01 : f32
    %403 = vector.broadcast %cst_131 : f32 to vector<8x128xf32>
    %404 = arith.mulf %359, %403 : vector<8x128xf32>
    %cst_132 = arith.constant 1.000000e+00 : f32
    %405 = vector.broadcast %cst_132 : f32 to vector<8x128xf32>
    %406 = arith.subf %405, %364 : vector<8x128xf32>
    %407 = arith.mulf %404, %406 : vector<8x128xf32>
    %408 = arith.addf %407, %393 : vector<8x128xf32>
    %409 = arith.cmpf ogt, %408, %402 : vector<8x128xf32>
    %410 = arith.extui %387 : vector<8x128xi1> to vector<8x128xi32>
    %411 = arith.sitofp %410 : vector<8x128xi32> to vector<8x128xf32>
    %412 = arith.extui %409 : vector<8x128xi1> to vector<8x128xi32>
    %413 = arith.sitofp %412 : vector<8x128xi32> to vector<8x128xf32>
    %c8_i32 = arith.constant 8 : i32
    %c0_133 = arith.constant 0 : index
    %c0_134 = arith.constant 0 : index
    %414 = vector.load %arg12[%c0_133, %c0_134] : memref<8x128xf32, #tpu.memory_space<vmem>>, vector<8x128xf32>
    tpu.vector_store %arg12[%c0_133, %c0_134], %386 {strides = array<i32>} : memref<8x128xf32, #tpu.memory_space<vmem>>, vector<8x128xf32>,
    %c0_135 = arith.constant 0 : index
    %c0_136 = arith.constant 0 : index
    %415 = vector.load %arg13[%c0_135, %c0_136] : memref<8x128xf32, #tpu.memory_space<vmem>>, vector<8x128xf32>
    tpu.vector_store %arg13[%c0_135, %c0_136], %411 {strides = array<i32>} : memref<8x128xf32, #tpu.memory_space<vmem>>, vector<8x128xf32>,
    %c0_137 = arith.constant 0 : index
    %c0_138 = arith.constant 0 : index
    %416 = vector.load %arg14[%c0_137, %c0_138] : memref<8x128xf32, #tpu.memory_space<vmem>>, vector<8x128xf32>
    tpu.vector_store %arg14[%c0_137, %c0_138], %380 {strides = array<i32>} : memref<8x128xf32, #tpu.memory_space<vmem>>, vector<8x128xf32>,
    %c0_139 = arith.constant 0 : index
    %c0_140 = arith.constant 0 : index
    %417 = vector.load %arg15[%c0_139, %c0_140] : memref<8x128xf32, #tpu.memory_space<vmem>>, vector<8x128xf32>
    tpu.vector_store %arg15[%c0_139, %c0_140], %394 {strides = array<i32>} : memref<8x128xf32, #tpu.memory_space<vmem>>, vector<8x128xf32>,
    %c0_141 = arith.constant 0 : index
    %c0_142 = arith.constant 0 : index
    %418 = vector.load %arg16[%c0_141, %c0_142] : memref<8x128xf32, #tpu.memory_space<vmem>>, vector<8x128xf32>
    tpu.vector_store %arg16[%c0_141, %c0_142], %408 {strides = array<i32>} : memref<8x128xf32, #tpu.memory_space<vmem>>, vector<8x128xf32>,
    %c0_143 = arith.constant 0 : index
    %c0_144 = arith.constant 0 : index
    %419 = vector.load %arg17[%c0_143, %c0_144] : memref<8x128xf32, #tpu.memory_space<vmem>>, vector<8x128xf32>
    tpu.vector_store %arg17[%c0_143, %c0_144], %413 {strides = array<i32>} : memref<8x128xf32, #tpu.memory_space<vmem>>, vector<8x128xf32>,
    %c0_145 = arith.constant 0 : index
    %c0_146 = arith.constant 0 : index
    %420 = vector.load %arg18[%c0_145, %c0_146] : memref<8x128xf32, #tpu.memory_space<vmem>>, vector<8x128xf32>
    tpu.vector_store %arg18[%c0_145, %c0_146], %402 {strides = array<i32>} : memref<8x128xf32, #tpu.memory_space<vmem>>, vector<8x128xf32>,
    %c0_i32_147 = arith.constant 0 : i32
    %421 = arith.cmpi eq, %arg1, %c0_i32_147 : i32
    %422 = arith.extui %421 : i1 to i32
    %c0_i32_148 = arith.constant 0 : i32
    %423 = arith.cmpi ne, %422, %c0_i32_148 : i32
    scf.if %423 {
      %c0_149 = arith.constant 0 : index
      %c0_150 = arith.constant 0 : index
      %424 = vector.load %arg9[%c0_149, %c0_150] : memref<128x128xf32, #tpu.memory_space<vmem>>, vector<128x128xf32>
      %cst_151 = arith.constant dense<0.000000e+00> : vector<8x128xf32>
      %425 = tpu.matmul %413, %424, %cst_151 {dimension_numbers = #tpu.dot_dimension_numbers<[1], [0], [0], [1], [0, 0, 1, 1], [], []>} : vector<8x128xf32>, vector<128x128xf32>, vector<8x128xf32> -> vector<8x128xf32>
      %c0_152 = arith.constant 0 : index
      %c0_153 = arith.constant 0 : index
      %426 = vector.load %arg10[%c0_152, %c0_153] : memref<1x128xf32, #tpu.memory_space<vmem>>, vector<1x128xf32>
      %427 = vector.broadcast %426 : vector<1x128xf32> to vector<8x128xf32>
      %428 = arith.addf %425, %427 : vector<8x128xf32>
      %c0_154 = arith.constant 0 : index
      %c0_155 = arith.constant 0 : index
      %429 = vector.load %arg11[%c0_154, %c0_155] : memref<8x128xf32, #tpu.memory_space<vmem>>, vector<8x128xf32>
      tpu.vector_store %arg11[%c0_154, %c0_155], %428 {strides = array<i32>} : memref<8x128xf32, #tpu.memory_space<vmem>>, vector<8x128xf32>,
    } else {
    }
    return
  }
  func.func @transform_0(%arg0: i32, %arg1: i32) -> (i32, i32, i32) {
    %c0_i32 = arith.constant 0 : i32
    %c0_i32_0 = arith.constant 0 : i32
    return %arg1, %arg0, %c0_i32 : i32, i32, i32
  }
  func.func @transform_1(%arg0: i32, %arg1: i32) -> (i32, i32) {
    %c0_i32 = arith.constant 0 : i32
    %c0_i32_0 = arith.constant 0 : i32
    return %arg1, %c0_i32 : i32, i32
  }
  func.func @transform_2(%arg0: i32, %arg1: i32) -> (i32, i32) {
    %c0_i32 = arith.constant 0 : i32
    %c0_i32_0 = arith.constant 0 : i32
    return %arg1, %c0_i32 : i32, i32
  }
  func.func @transform_3(%arg0: i32, %arg1: i32) -> (i32, i32) {
    %c0_i32 = arith.constant 0 : i32
    %c0_i32_0 = arith.constant 0 : i32
    %c0_i32_1 = arith.constant 0 : i32
    return %c0_i32, %c0_i32_0 : i32, i32
  }
  func.func @transform_4(%arg0: i32, %arg1: i32) -> (i32, i32) {
    %c0_i32 = arith.constant 0 : i32
    %c0_i32_0 = arith.constant 0 : i32
    %c0_i32_1 = arith.constant 0 : i32
    return %c0_i32, %c0_i32_0 : i32, i32
  }
  func.func @transform_5(%arg0: i32, %arg1: i32) -> (i32, i32) {
    %c0_i32 = arith.constant 0 : i32
    %c0_i32_0 = arith.constant 0 : i32
    %c0_i32_1 = arith.constant 0 : i32
    return %c0_i32, %c0_i32_0 : i32, i32
  }
  func.func @transform_6(%arg0: i32, %arg1: i32) -> (i32, i32) {
    %c0_i32 = arith.constant 0 : i32
    %c0_i32_0 = arith.constant 0 : i32
    %c0_i32_1 = arith.constant 0 : i32
    return %c0_i32, %c0_i32_0 : i32, i32
  }
  func.func @transform_7(%arg0: i32, %arg1: i32) -> (i32, i32) {
    %c0_i32 = arith.constant 0 : i32
    %c0_i32_0 = arith.constant 0 : i32
    %c0_i32_1 = arith.constant 0 : i32
    return %c0_i32, %c0_i32_0 : i32, i32
  }
  func.func @transform_8(%arg0: i32, %arg1: i32) -> (i32, i32) {
    %c0_i32 = arith.constant 0 : i32
    %c0_i32_0 = arith.constant 0 : i32
    %c0_i32_1 = arith.constant 0 : i32
    return %c0_i32, %c0_i32_0 : i32, i32
  }
  func.func @transform_9(%arg0: i32, %arg1: i32) -> (i32, i32) {
    %c0_i32 = arith.constant 0 : i32
    %c0_i32_0 = arith.constant 0 : i32
    return %arg0, %c0_i32 : i32, i32
  }
}

</mosaic_0001>

<llo_original>
// kernel: tpu_custom_call.1
$region0: #{tpu_custom_call.1}
  #allocation0 [shape = 'u32[]', space=smem, size = 0x4, offset = 0x4, fixed_abs, tag = 'smem constant byte address 0x4 - core index']
  #allocation1 [shape = 'u32[144,128]{1,0:T(1,128)}', space=vmem, size = 0x12000, scoped, tag = 'internal scratch']
  #allocation2 [shape = 'f32[8,128]{1,0:T(8,128)}', space=vmem, size = 0x1000, scoped, tag = 'scratch operand']
  #allocation3 [shape = 'f32[8,128]{1,0:T(8,128)}', space=vmem, size = 0x1000, scoped, tag = 'scratch operand']
  #allocation4 [shape = 'f32[8,128]{1,0:T(8,128)}', space=vmem, size = 0x1000, scoped, tag = 'scratch operand']
  #allocation5 [shape = 'f32[8,128]{1,0:T(8,128)}', space=vmem, size = 0x1000, scoped, tag = 'scratch operand']
  #allocation6 [shape = 'f32[8,128]{1,0:T(8,128)}', space=vmem, size = 0x1000, scoped, tag = 'scratch operand']
  #allocation7 [shape = 'f32[8,128]{1,0:T(8,128)}', space=vmem, size = 0x1000, scoped, tag = 'scratch operand']
  #allocation8 [shape = 'f32[8,128]{1,0:T(8,128)}', space=vmem, size = 0x1000, scoped, tag = 'scratch operand']
  #allocation9 [shape = 'f32[8,8,128]{2,1,0:T(8,128)}', space=vmem, size = 0x8000, scoped, tag = 'scratch operand']
  #allocation10 [shape = 'f32[8,8,128]{2,1,0:T(8,128)}', space=vmem, size = 0x8000, scoped, tag = 'scratch operand']
  %s0 = inlined_call_operand.vmem [shape: f32[8,8,4], index: 0, kind: input, shape index: {}]
  %s1 = inlined_call_operand.vmem [shape: f32[8,128], index: 1, kind: input, shape index: {}]
  %s2 = inlined_call_operand.vmem [shape: f32[8,128], index: 2, kind: input, shape index: {}]
  %s3 = inlined_call_operand.vmem [shape: f32[4,128], index: 3, kind: input, shape index: {}]
  %s4 = inlined_call_operand.vmem [shape: f32[1,128], index: 4, kind: input, shape index: {}]
  %s5 = inlined_call_operand.hbm [shape: f32[128,256], index: 5, kind: input, shape index: {}]
  %s6 = inlined_call_operand.vmem [shape: f32[1,128], index: 6, kind: input, shape index: {}]
  %s7 = inlined_call_operand.hbm [shape: f32[128,128], index: 7, kind: input, shape index: {}]
  %s8 = inlined_call_operand.vmem [shape: f32[1,128], index: 8, kind: input, shape index: {}]
  %s9 = inlined_call_operand.hbm [shape: f32[8,128], index: 9, kind: output, shape index: {}]
  %s10 = sld [smem:[#allocation0]]
  $region62: #{tpu_custom_call.1} parent=0
    _
  %s12 = ssub.s32 1, %s10
  %s13 = scalar_select 0, %s12, %s10
  $region1: #{tpu_custom_call.1} parent=0
    #allocation11 [shape = 'u8[131072]{0}', space=vmem, size = 0x20000, scoped, tag = 'input window, operand 5, single buffered']
    #allocation12 [shape = 's32[1]{0}', space=sflag, size = 0x4, scoped, tag = 'scoped memory for tpu_custom_call.1']
    #allocation13 [shape = 's32[1]{0}', space=sflag, size = 0x4, scoped, tag = 'scoped memory for tpu_custom_call.1']
    #allocation14 [shape = 'u8[65536]{0}', space=vmem, size = 0x10000, scoped, tag = 'input window, operand 7, single buffered']
    #allocation15 [shape = 's32[1]{0}', space=sflag, size = 0x4, scoped, tag = 'scoped memory for tpu_custom_call.1']
    #allocation16 [shape = 'u8[4096]{0}', space=vmem, size = 0x1000, scoped, tag = 'output window, operand 0, single buffered']
    %14 = vsyncpa [#allocation12], 0
    %15 = vsyncpa [#allocation15], 0
    %16 = vsyncpa [#allocation13], 0
    // Predicated region
    $region2: #{tpu_custom_call.1} parent=1 // pred_check
      _
    $region3: #{tpu_custom_call.1} parent=1 // pred_check_branch
      %18 = sbr.rel (0) target = $region5
    $region4: #{tpu_custom_call.1} parent=1 // pred_region
      _
    $region5: #{tpu_custom_call.1} parent=1 // pred_fallthru
      _
    // Predicated region
    $region6: #{tpu_custom_call.1} parent=1 // pred_check
      _
    $region7: #{tpu_custom_call.1} parent=1 // pred_check_branch
      %20 = sbr.rel (0) target = $region9
    $region8: #{tpu_custom_call.1} parent=1 // pred_region
      _
    $region9: #{tpu_custom_call.1} parent=1 // pred_fallthru
      _
    // Predicated region
    $region10: #{tpu_custom_call.1} parent=1 // pred_check
      _
    $region11: #{tpu_custom_call.1} parent=1 // pred_check_branch
      %22 = sbr.rel (0) target = $region13
    $region12: #{tpu_custom_call.1} parent=1 // pred_region
      _
    $region13: #{tpu_custom_call.1} parent=1 // pred_fallthru
      _
    // Predicated region
    $region14: #{tpu_custom_call.1} parent=1 // pred_check
      _
    $region15: #{tpu_custom_call.1} parent=1 // pred_check_branch
      %24 = sbr.rel (0) target = $region17
    $region16: #{tpu_custom_call.1} parent=1 // pred_region
      _
    $region17: #{tpu_custom_call.1} parent=1 // pred_fallthru
      _
    // Predicated region
    $region18: #{tpu_custom_call.1} parent=1 // pred_check
      _
    $region19: #{tpu_custom_call.1} parent=1 // pred_check_branch
      %26 = sbr.rel (0) target = $region21
    $region20: #{tpu_custom_call.1} parent=1 // pred_region
      _
    $region21: #{tpu_custom_call.1} parent=1 // pred_fallthru
      _
    // Predicated region
    $region22: #{tpu_custom_call.1} parent=1 // pred_check
      _
    $region23: #{tpu_custom_call.1} parent=1 // pred_check_branch
      %28 = sbr.rel (0) target = $region25
    $region24: #{tpu_custom_call.1} parent=1 // pred_region
      %s30 = ssub.s32 4096, 4096
      %31 = vsyncadd [#allocation12], %s30
      %s32 = sshll.u32 [#allocation11], 4
      %s33 = int_to_ptr.vmem [resolvable:$true] %s32
      %38 = dma.hbm_to_vmem [thread:$0]  %s5, 4096, %s33, [#allocation12], 256, 256, 16
    $region25: #{tpu_custom_call.1} parent=1 // pred_fallthru
      _
    // Predicated region
    $region26: #{tpu_custom_call.1} parent=1 // pred_check
      _
    $region27: #{tpu_custom_call.1} parent=1 // pred_check_branch
      %40 = sbr.rel (0) target = $region29
    $region28: #{tpu_custom_call.1} parent=1 // pred_region
      _
    $region29: #{tpu_custom_call.1} parent=1 // pred_fallthru
      _
    // Predicated region
    $region30: #{tpu_custom_call.1} parent=1 // pred_check
      _
    $region31: #{tpu_custom_call.1} parent=1 // pred_check_branch
      %42 = sbr.rel (0) target = $region33
    $region32: #{tpu_custom_call.1} parent=1 // pred_region
      %s44 = ssub.s32 2048, 2048
      %45 = vsyncadd [#allocation15], %s44
      %s46 = sshll.u32 [#allocation14], 4
      %s47 = int_to_ptr.vmem [resolvable:$true] %s46
      %52 = dma.hbm_to_vmem [thread:$0]  %s7, 2048, %s47, [#allocation15], 128, 128, 8
    $region33: #{tpu_custom_call.1} parent=1 // pred_fallthru
      _
    // Predicated region
    $region34: #{tpu_custom_call.1} parent=1 // pred_check
      _
    $region35: #{tpu_custom_call.1} parent=1 // pred_check_branch
      %54 = sbr.rel (0) target = $region37
    $region36: #{tpu_custom_call.1} parent=1 // pred_region
      _
    $region37: #{tpu_custom_call.1} parent=1 // pred_fallthru
      _
    // Predicated region
    $region38: #{tpu_custom_call.1} parent=1 // pred_check
      _
    $region39: #{tpu_custom_call.1} parent=1 // pred_check_branch
      %56 = sbr.rel (0) target = $region41
    $region40: #{tpu_custom_call.1} parent=1 // pred_region
      %57 = dma.done [#allocation12], 4096
    $region41: #{tpu_custom_call.1} parent=1 // pred_fallthru
      _
    // Predicated region
    $region42: #{tpu_custom_call.1} parent=1 // pred_check
      _
    $region43: #{tpu_custom_call.1} parent=1 // pred_check_branch
      %59 = sbr.rel (0) target = $region45
    $region44: #{tpu_custom_call.1} parent=1 // pred_region
      %60 = dma.done [#allocation15], 2048
    $region45: #{tpu_custom_call.1} parent=1 // pred_fallthru
      _
    %p61 = scmp.eq.s32.totalorder 0, 0
    // Predicated region
    $region46: #{tpu_custom_call.1} parent=1 // pred_check
      %p62 = pneg %p61
    $region47: #{tpu_custom_call.1} parent=1 // pred_check_branch
      %64 = sbr.rel (%p62) target = $region49
    $region48: #{tpu_custom_call.1} parent=1 // pred_region
      %65 = vst [vmem:[#allocation2] sm:$0xff] 0.0
      %66 = vst [vmem:[#allocation3] sm:$0xff] 0.0
      %67 = vst [vmem:[#allocation4] sm:$0xff] 0.3
      %68 = vst [vmem:[#allocation5] sm:$0xff] 0.0
      %69 = vst [vmem:[#allocation6] sm:$0xff] 0.0
      %70 = vst [vmem:[#allocation7] sm:$0xff] 0.0
      %71 = vst [vmem:[#allocation8] sm:$0xff] 0.3
    $region49: #{tpu_custom_call.1} parent=1 // pred_fallthru
      _
    %v72 = vld [vmem:[%s0] sm:$0xff]
    %v73 = vld [vmem:[%s0 + $0x8] sm:$0xff]
    %v74 = vld [vmem:[%s0 + $0x10] sm:$0xff]
    %v75 = vld [vmem:[%s0 + $0x18] sm:$0xff]
    %v76 = vld [vmem:[%s0 + $0x20] sm:$0xff]
    %v77 = vld [vmem:[%s0 + $0x28] sm:$0xff]
    %v78 = vld [vmem:[%s0 + $0x30] sm:$0xff]
    %v79 = vld [vmem:[%s0 + $0x38] sm:$0xff]
    %v80 = vld [vmem:[%s3] sm:$0xf]
    %vm81 = vcmask 31744
    %v83 = vsel %vm81, %v72, 0
    %v86 = vsel %vm81, %v73, 0
    %v89 = vsel %vm81, %v74, 0
    %v92 = vsel %vm81, %v75, 0
    %v95 = vsel %vm81, %v76, 0
    %v98 = vsel %vm81, %v77, 0
    %v101 = vsel %vm81, %v78, 0
    %v104 = vsel %vm81, %v79, 0
    %vm106 = vcmask 1043456
    %v108 = vsel %vm106, %v80, 0
    %110 = vmatprep.subr.mxu0 0.0
    %111 = vmatpush1.msra.mxu0 0.0
    %112 = vmatprep.subr.mxu0 0.0
    %113 = vmatpush1.msra.mxu0 0.0
    %114 = vmatprep.subr.mxu0 0.0
    %115 = vmatpush1.msra.mxu0 0.0
    %116 = vmatprep.subr.mxu0 0.0
    %117 = vmatpush1.msra.mxu0 0.0
    %118 = vmatprep.subr.mxu0 0.0
    %119 = vmatpush1.msra.mxu0 0.0
    %120 = vmatprep.subr.mxu0 0.0
    %121 = vmatpush1.msra.mxu0 0.0
    %122 = vmatprep.subr.mxu0 0.0
    %123 = vmatpush1.msra.mxu0 0.0
    %124 = vmatprep.subr.mxu0 0.0
    %125 = vmatpush1.msra.mxu0 0.0
    %126 = vmatprep.subr.mxu0 0.0
    %127 = vmatpush1.msra.mxu0 0.0
    %128 = vmatprep.subr.mxu0 0.0
    %129 = vmatpush1.msra.mxu0 0.0
    %130 = vmatprep.subr.mxu0 0.0
    %131 = vmatpush1.msra.mxu0 0.0
    %132 = vmatprep.subr.mxu0 0.0
    %133 = vmatpush1.msra.mxu0 0.0
    %134 = vmatprep.subr.mxu0 0.0
    %135 = vmatpush1.msra.mxu0 0.0
    %136 = vmatprep.subr.mxu0 0.0
    %137 = vmatpush1.msra.mxu0 0.0
    %138 = vmatprep.subr.mxu0 0.0
    %139 = vmatpush1.msra.mxu0 0.0
    %140 = vmatprep.subr.mxu0 0.0
    %141 = vmatpush1.msra.mxu0 %v108
    %142 = vmatprep.subr.mxu0 0.0
    %143 = vmatpush2.msra.mxu0 0.0
    %144 = vmatprep.subr.mxu0 0.0
    %145 = vmatpush2.msra.mxu0 0.0
    %146 = vmatprep.subr.mxu0 0.0
    %147 = vmatpush2.msra.mxu0 0.0
    %148 = vmatprep.subr.mxu0 0.0
    %149 = vmatpush2.msra.mxu0 0.0
    %150 = vmatprep.subr.mxu0 0.0
    %151 = vmatpush2.msra.mxu0 0.0
    %152 = vmatprep.subr.mxu0 0.0
    %153 = vmatpush2.msra.mxu0 0.0
    %154 = vmatprep.subr.mxu0 0.0
    %155 = vmatpush2.msra.mxu0 0.0
    %156 = vmatprep.subr.mxu0 0.0
    %157 = vmatpush2.msra.mxu0 0.0
    %158 = vmatprep.subr.mxu0 0.0
    %159 = vmatpush2.msra.mxu0 0.0
    %160 = vmatprep.subr.mxu0 0.0
    %161 = vmatpush2.msra.mxu0 0.0
    %162 = vmatprep.subr.mxu0 0.0
    %163 = vmatpush2.msra.mxu0 0.0
    %164 = vmatprep.subr.mxu0 0.0
    %165 = vmatpush2.msra.mxu0 0.0
    %166 = vmatprep.subr.mxu0 0.0
    %167 = vmatpush2.msra.mxu0 0.0
    %168 = vmatprep.subr.mxu0 0.0
    %169 = vmatpush2.msra.mxu0 0.0
    %170 = vmatprep.subr.mxu0 0.0
    %171 = vmatpush2.msra.mxu0 0.0
    %172 = vmatprep.subr.mxu0 0.0
    %173 = vmatpush2.msra.mxu0 0.0
    %174 = vmatprep.mubr.f32.mxu0 0.0
    %175 = vmatmul.mubr.f32.gmra.mxu0 %v83
    %v176 = vpop.f32.mrf.mxu0
    %v177 = vadd.f32 0.0, %v176
    %v178 = vpop.f32.mrf.mxu0
    %179 = vmatprep.mubr.f32.mxu0 0.0
    %180 = vmatmul.mubr.f32.gmra.mxu0 %v86
    %v181 = vpop.f32.mrf.mxu0
    %v182 = vadd.f32 0.0, %v181
    %v183 = vpop.f32.mrf.mxu0
    %184 = vmatprep.mubr.f32.mxu0 0.0
    %185 = vmatmul.mubr.f32.gmra.mxu0 %v89
    %v186 = vpop.f32.mrf.mxu0
    %v187 = vadd.f32 0.0, %v186
    %v188 = vpop.f32.mrf.mxu0
    %189 = vmatprep.mubr.f32.mxu0 0.0
    %190 = vmatmul.mubr.f32.gmra.mxu0 %v92
    %v191 = vpop.f32.mrf.mxu0
    %v192 = vadd.f32 0.0, %v191
    %v193 = vpop.f32.mrf.mxu0
    %194 = vmatprep.mubr.f32.mxu0 0.0
    %195 = vmatmul.mubr.f32.gmra.mxu0 %v95
    %v196 = vpop.f32.mrf.mxu0
    %v197 = vadd.f32 0.0, %v196
    %v198 = vpop.f32.mrf.mxu0
    %199 = vmatprep.mubr.f32.mxu0 0.0
    %200 = vmatmul.mubr.f32.gmra.mxu0 %v98
    %v201 = vpop.f32.mrf.mxu0
    %v202 = vadd.f32 0.0, %v201
    %v203 = vpop.f32.mrf.mxu0
    %204 = vmatprep.mubr.f32.mxu0 0.0
    %205 = vmatmul.mubr.f32.gmra.mxu0 %v101
    %v206 = vpop.f32.mrf.mxu0
    %v207 = vadd.f32 0.0, %v206
    %v208 = vpop.f32.mrf.mxu0
    %209 = vmatprep.mubr.f32.mxu0 0.0
    %210 = vmatmul.mubr.f32.gmra.mxu0 %v104
    %v211 = vpop.f32.mrf.mxu0
    %v212 = vadd.f32 0.0, %v211
    %v213 = vpop.f32.mrf.mxu0
    %214 = vdwg.mxu0
    %v215 = vld [vmem:[%s4] sm:$0x1]
    %v217 = vlaneseq
    %v218 = vshrl.u32 %v217, 7
    %v219 = vsub.s32 0, %v218
    %v220 = vrot.slane %v215, %v219
    %v222 = vadd.f32 %v177, %v220
    %v223 = vadd.f32 %v182, %v220
    %v224 = vadd.f32 %v187, %v220
    %v225 = vadd.f32 %v192, %v220
    %v226 = vadd.f32 %v197, %v220
    %v227 = vadd.f32 %v202, %v220
    %v228 = vadd.f32 %v207, %v220
    %v229 = vadd.f32 %v212, %v220
    %230 = vst [vmem:[#allocation9] sm:$0xff] %v222
    %231 = vst [vmem:[#allocation9 + $0x8] sm:$0xff] %v223
    %232 = vst [vmem:[#allocation9 + $0x10] sm:$0xff] %v224
    %233 = vst [vmem:[#allocation9 + $0x18] sm:$0xff] %v225
    %234 = vst [vmem:[#allocation9 + $0x20] sm:$0xff] %v226
    %235 = vst [vmem:[#allocation9 + $0x28] sm:$0xff] %v227
    %236 = vst [vmem:[#allocation9 + $0x30] sm:$0xff] %v228
    %237 = vst [vmem:[#allocation9 + $0x38] sm:$0xff] %v229
    %v238 = vld [vmem:[#allocation11] sm:$0xff]
    %v239 = vld [vmem:[#allocation11 + $0x8] sm:$0xff]
    %v240 = vld [vmem:[#allocation11 + $0x10] sm:$0xff]
    %v241 = vld [vmem:[#allocation11 + $0x18] sm:$0xff]
    %v242 = vld [vmem:[#allocation11 + $0x20] sm:$0xff]
    %v243 = vld [vmem:[#allocation11 + $0x28] sm:$0xff]
    %v244 = vld [vmem:[#allocation11 + $0x30] sm:$0xff]
    %v245 = vld [vmem:[#allocation11 + $0x38] sm:$0xff]
    %v246 = vld [vmem:[#allocation11 + $0x40] sm:$0xff]
    %v247 = vld [vmem:[#allocation11 + $0x48] sm:$0xff]
    %v248 = vld [vmem:[#allocation11 + $0x50] sm:$0xff]
    %v249 = vld [vmem:[#allocation11 + $0x58] sm:$0xff]
    %v250 = vld [vmem:[#allocation11 + $0x60] sm:$0xff]
    %v251 = vld [vmem:[#allocation11 + $0x68] sm:$0xff]
    %v252 = vld [vmem:[#allocation11 + $0x70] sm:$0xff]
    %v253 = vld [vmem:[#allocation11 + $0x78] sm:$0xff]
    %v254 = vld [vmem:[#allocation11 + $0x80] sm:$0xff]
    %v255 = vld [vmem:[#allocation11 + $0x88] sm:$0xff]
    %v256 = vld [vmem:[#allocation11 + $0x90] sm:$0xff]
    %v257 = vld [vmem:[#allocation11 + $0x98] sm:$0xff]
    %v258 = vld [vmem:[#allocation11 + $0xa0] sm:$0xff]
    %v259 = vld [vmem:[#allocation11 + $0xa8] sm:$0xff]
    %v260 = vld [vmem:[#allocation11 + $0xb0] sm:$0xff]
    %v261 = vld [vmem:[#allocation11 + $0xb8] sm:$0xff]
    %v262 = vld [vmem:[#allocation11 + $0xc0] sm:$0xff]
    %v263 = vld [vmem:[#allocation11 + $0xc8] sm:$0xff]
    %v264 = vld [vmem:[#allocation11 + $0xd0] sm:$0xff]
    %v265 = vld [vmem:[#allocation11 + $0xd8] sm:$0xff]
    %v266 = vld [vmem:[#allocation11 + $0xe0] sm:$0xff]
    %v267 = vld [vmem:[#allocation11 + $0xe8] sm:$0xff]
    %v268 = vld [vmem:[#allocation11 + $0xf0] sm:$0xff]
    %v269 = vld [vmem:[#allocation11 + $0xf8] sm:$0xff]
    %v270 = vld [vmem:[%s6] sm:$0x1]
    %v271 = vld [vmem:[#allocation2] sm:$0xff]
    %v272 = vld [vmem:[#allocation3] sm:$0xff]
    %v273 = vld [vmem:[#allocation4] sm:$0xff]
    %v274 = vld [vmem:[#allocation5] sm:$0xff]
    %v275 = vld [vmem:[#allocation6] sm:$0xff]
    %v276 = vld [vmem:[#allocation7] sm:$0xff]
    %v277 = vld [vmem:[#allocation8] sm:$0xff]
    %v278 = vld [vmem:[%s1] sm:$0x1]
    %v279 = vld [vmem:[%s2] sm:$0x1]
    %v280 = vld [vmem:[#allocation9] sm:$0xff]
    %v281 = vadd.f32 %v280, %v274
    %v282 = vlaneseq
    %v283 = vshrl.u32 %v282, 7
    %v284 = vsub.s32 0, %v283
    %v285 = vrot.slane %v278, %v284
    %v286 = vmul.f32 %v271, %v285
    %v287 = vadd.f32 %v273, %v286
    %v288 = vsub.f32 %v273, 0.3
    %v289 = vmul.f32 %v288, 0.02
    %v290 = vsub.f32 %v287, %v289
    %v291 = vmul.f32 %v271, 0.5
    %v292 = vsub.f32 1.0, %v272
    %v293 = vmul.f32 %v291, %v292
    %v294 = vadd.f32 %v293, %v281
    %vm295 = vcmp.gt.f32.partialorder %v294, %v290
    %v296 = vsel %vm295, 1, 0
    %v297 = vcvt.s32.f32 %v296
    %298 = vmatprep.subr.mxu0 %v269
    %299 = vmatpush1.msra.mxu0 %v268
    %300 = vmatprep.subr.mxu0 %v267
    %301 = vmatpush1.msra.mxu0 %v266
    %302 = vmatprep.subr.mxu0 %v265
    %303 = vmatpush1.msra.mxu0 %v264
    %304 = vmatprep.subr.mxu0 %v263
    %305 = vmatpush1.msra.mxu0 %v262
    %306 = vmatprep.subr.mxu0 %v261
    %307 = vmatpush1.msra.mxu0 %v260
    %308 = vmatprep.subr.mxu0 %v259
    %309 = vmatpush1.msra.mxu0 %v258
    %310 = vmatprep.subr.mxu0 %v257
    %311 = vmatpush1.msra.mxu0 %v256
    %312 = vmatprep.subr.mxu0 %v255
    %313 = vmatpush1.msra.mxu0 %v254
    %314 = vmatprep.subr.mxu0 %v253
    %315 = vmatpush1.msra.mxu0 %v252
    %316 = vmatprep.subr.mxu0 %v251
    %317 = vmatpush1.msra.mxu0 %v250
    %318 = vmatprep.subr.mxu0 %v249
    %319 = vmatpush1.msra.mxu0 %v248
    %320 = vmatprep.subr.mxu0 %v247
    %321 = vmatpush1.msra.mxu0 %v246
    %322 = vmatprep.subr.mxu0 %v245
    %323 = vmatpush1.msra.mxu0 %v244
    %324 = vmatprep.subr.mxu0 %v243
    %325 = vmatpush1.msra.mxu0 %v242
    %326 = vmatprep.subr.mxu0 %v241
    %327 = vmatpush1.msra.mxu0 %v240
    %328 = vmatprep.subr.mxu0 %v239
    %329 = vmatpush1.msra.mxu0 %v238
    %330 = vmatprep.subr.mxu0 0.0
    %331 = vmatpush2.msra.mxu0 0.0
    %332 = vmatprep.subr.mxu0 0.0
    %333 = vmatpush2.msra.mxu0 0.0
    %334 = vmatprep.subr.mxu0 0.0
    %335 = vmatpush2.msra.mxu0 0.0
    %336 = vmatprep.subr.mxu0 0.0
    %337 = vmatpush2.msra.mxu0 0.0
    %338 = vmatprep.subr.mxu0 0.0
    %339 = vmatpush2.msra.mxu0 0.0
    %340 = vmatprep.subr.mxu0 0.0
    %341 = vmatpush2.msra.mxu0 0.0
    %342 = vmatprep.subr.mxu0 0.0
    %343 = vmatpush2.msra.mxu0 0.0
    %344 = vmatprep.subr.mxu0 0.0
    %345 = vmatpush2.msra.mxu0 0.0
    %346 = vmatprep.subr.mxu0 0.0
    %347 = vmatpush2.msra.mxu0 0.0
    %348 = vmatprep.subr.mxu0 0.0
    %349 = vmatpush2.msra.mxu0 0.0
    %350 = vmatprep.subr.mxu0 0.0
    %351 = vmatpush2.msra.mxu0 0.0
    %352 = vmatprep.subr.mxu0 0.0
    %353 = vmatpush2.msra.mxu0 0.0
    %354 = vmatprep.subr.mxu0 0.0
    %355 = vmatpush2.msra.mxu0 0.0
    %356 = vmatprep.subr.mxu0 0.0
    %357 = vmatpush2.msra.mxu0 0.0
    %358 = vmatprep.subr.mxu0 0.0
    %359 = vmatpush2.msra.mxu0 0.0
    %360 = vmatprep.subr.mxu0 0.0
    %361 = vmatpush2.msra.mxu0 0.0
    %362 = vmatprep.mubr.f32.mxu0 0.0
    %363 = vmatmul.mubr.f32.gmra.mxu0 %v297
    %v364 = vpop.f32.mrf.mxu0
    %v365 = vadd.f32 0.0, %v364
    %v366 = vpop.f32.mrf.mxu0
    %v367 = vadd.f32 0.0, %v366
    %368 = vdwg.mxu0
    %v370 = vlaneseq
    %v371 = vshrl.u32 %v370, 7
    %v372 = vsub.s32 0, %v371
    %v373 = vrot.slane %v270, %v372
    %v375 = vadd.f32 %v365, %v373
    %v376 = vlaneseq
    %v377 = vshrl.u32 %v376, 7
    %v378 = vsub.s32 0, %v377
    %v379 = vrot.slane %v279, %v378
    %v380 = vmul.f32 %v275, %v379
    %v381 = vadd.f32 %v277, %v380
    %v382 = vsub.f32 %v277, 0.3
    %v383 = vmul.f32 %v382, 0.02
    %v384 = vsub.f32 %v381, %v383
    %v385 = vmul.f32 %v275, 0.5
    %v386 = vsub.f32 1.0, %v276
    %v387 = vmul.f32 %v385, %v386
    %v388 = vadd.f32 %v387, %v375
    %vm389 = vcmp.gt.f32.partialorder %v388, %v384
    %v390 = vsel %vm389, 1, 0
    %v391 = vcvt.s32.f32 %v390
    %v392 = vld [vmem:[%s1 + $0x1] sm:$0x1]
    %v393 = vld [vmem:[%s2 + $0x1] sm:$0x1]
    %s394 = scalar_lea.vmem [#allocation9], 8
    %v395 = vld [vmem:[%s394] sm:$0xff]
    %v396 = vadd.f32 %v395, %v367
    %v397 = vlaneseq
    %v398 = vshrl.u32 %v397, 7
    %v399 = vsub.s32 0, %v398
    %v400 = vrot.slane %v392, %v399
    %v401 = vmul.f32 %v294, %v400
    %v402 = vadd.f32 %v290, %v401
    %v403 = vsub.f32 %v290, 0.3
    %v404 = vmul.f32 %v403, 0.02
    %v405 = vsub.f32 %v402, %v404
    %v406 = vmul.f32 %v294, 0.5
    %v407 = vsub.f32 1.0, %v297
    %v408 = vmul.f32 %v406, %v407
    %v409 = vadd.f32 %v408, %v396
    %vm410 = vcmp.gt.f32.partialorder %v409, %v405
    %v411 = vsel %vm410, 1, 0
    %v412 = vcvt.s32.f32 %v411
    %413 = vmatprep.subr.mxu0 %v269
    %414 = vmatpush1.msra.mxu0 %v268
    %415 = vmatprep.subr.mxu0 %v267
    %416 = vmatpush1.msra.mxu0 %v266
    %417 = vmatprep.subr.mxu0 %v265
    %418 = vmatpush1.msra.mxu0 %v264
    %419 = vmatprep.subr.mxu0 %v263
    %420 = vmatpush1.msra.mxu0 %v262
    %421 = vmatprep.subr.mxu0 %v261
    %422 = vmatpush1.msra.mxu0 %v260
    %423 = vmatprep.subr.mxu0 %v259
    %424 = vmatpush1.msra.mxu0 %v258
    %425 = vmatprep.subr.mxu0 %v257
    %426 = vmatpush1.msra.mxu0 %v256
    %427 = vmatprep.subr.mxu0 %v255
    %428 = vmatpush1.msra.mxu0 %v254
    %429 = vmatprep.subr.mxu0 %v253
    %430 = vmatpush1.msra.mxu0 %v252
    %431 = vmatprep.subr.mxu0 %v251
    %432 = vmatpush1.msra.mxu0 %v250
    %433 = vmatprep.subr.mxu0 %v249
    %434 = vmatpush1.msra.mxu0 %v248
    %435 = vmatprep.subr.mxu0 %v247
    %436 = vmatpush1.msra.mxu0 %v246
    %437 = vmatprep.subr.mxu0 %v245
    %438 = vmatpush1.msra.mxu0 %v244
    %439 = vmatprep.subr.mxu0 %v243
    %440 = vmatpush1.msra.mxu0 %v242
    %441 = vmatprep.subr.mxu0 %v241
    %442 = vmatpush1.msra.mxu0 %v240
    %443 = vmatprep.subr.mxu0 %v239
    %444 = vmatpush1.msra.mxu0 %v238
    %445 = vmatprep.subr.mxu0 0.0
    %446 = vmatpush2.msra.mxu0 0.0
    %447 = vmatprep.subr.mxu0 0.0
    %448 = vmatpush2.msra.mxu0 0.0
    %449 = vmatprep.subr.mxu0 0.0
    %450 = vmatpush2.msra.mxu0 0.0
    %451 = vmatprep.subr.mxu0 0.0
    %452 = vmatpush2.msra.mxu0 0.0
    %453 = vmatprep.subr.mxu0 0.0
    %454 = vmatpush2.msra.mxu0 0.0
    %455 = vmatprep.subr.mxu0 0.0
    %456 = vmatpush2.msra.mxu0 0.0
    %457 = vmatprep.subr.mxu0 0.0
    %458 = vmatpush2.msra.mxu0 0.0
    %459 = vmatprep.subr.mxu0 0.0
    %460 = vmatpush2.msra.mxu0 0.0
    %461 = vmatprep.subr.mxu0 0.0
    %462 = vmatpush2.msra.mxu0 0.0
    %463 = vmatprep.subr.mxu0 0.0
    %464 = vmatpush2.msra.mxu0 0.0
    %465 = vmatprep.subr.mxu0 0.0
    %466 = vmatpush2.msra.mxu0 0.0
    %467 = vmatprep.subr.mxu0 0.0
    %468 = vmatpush2.msra.mxu0 0.0
    %469 = vmatprep.subr.mxu0 0.0
    %470 = vmatpush2.msra.mxu0 0.0
    %471 = vmatprep.subr.mxu0 0.0
    %472 = vmatpush2.msra.mxu0 0.0
    %473 = vmatprep.subr.mxu0 0.0
    %474 = vmatpush2.msra.mxu0 0.0
    %475 = vmatprep.subr.mxu0 0.0
    %476 = vmatpush2.msra.mxu0 0.0
    %477 = vmatprep.mubr.f32.mxu0 0.0
    %478 = vmatmul.mubr.f32.gmra.mxu0 %v412
    %v479 = vpop.f32.mrf.mxu0
    %v480 = vadd.f32 0.0, %v479
    %v481 = vpop.f32.mrf.mxu0
    %v482 = vadd.f32 0.0, %v481
    %483 = vdwg.mxu0
    %v484 = vadd.f32 %v480, %v373
    %v485 = vlaneseq
    %v486 = vshrl.u32 %v485, 7
    %v487 = vsub.s32 0, %v486
    %v488 = vrot.slane %v393, %v487
    %v489 = vmul.f32 %v388, %v488
    %v490 = vadd.f32 %v384, %v489
    %v491 = vsub.f32 %v384, 0.3
    %v492 = vmul.f32 %v491, 0.02
    %v493 = vsub.f32 %v490, %v492
    %v494 = vmul.f32 %v388, 0.5
    %v495 = vsub.f32 1.0, %v391
    %v496 = vmul.f32 %v494, %v495
    %v497 = vadd.f32 %v496, %v484
    %vm498 = vcmp.gt.f32.partialorder %v497, %v493
    %v499 = vsel %vm498, 1, 0
    %v500 = vcvt.s32.f32 %v499
    %v501 = vld [vmem:[%s1 + $0x2] sm:$0x1]
    %v502 = vld [vmem:[%s2 + $0x2] sm:$0x1]
    %s503 = scalar_lea.vmem [#allocation9], 16
    %v504 = vld [vmem:[%s503] sm:$0xff]
    %v505 = vadd.f32 %v504, %v482
    %v506 = vlaneseq
    %v507 = vshrl.u32 %v506, 7
    %v508 = vsub.s32 0, %v507
    %v509 = vrot.slane %v501, %v508
    %v510 = vmul.f32 %v409, %v509
    %v511 = vadd.f32 %v405, %v510
    %v512 = vsub.f32 %v405, 0.3
    %v513 = vmul.f32 %v512, 0.02
    %v514 = vsub.f32 %v511, %v513
    %v515 = vmul.f32 %v409, 0.5
    %v516 = vsub.f32 1.0, %v412
    %v517 = vmul.f32 %v515, %v516
    %v518 = vadd.f32 %v517, %v505
    %vm519 = vcmp.gt.f32.partialorder %v518, %v514
    %v520 = vsel %vm519, 1, 0
    %v521 = vcvt.s32.f32 %v520
    %522 = vmatprep.subr.mxu0 %v269
    %523 = vmatpush1.msra.mxu0 %v268
    %524 = vmatprep.subr.mxu0 %v267
    %525 = vmatpush1.msra.mxu0 %v266
    %526 = vmatprep.subr.mxu0 %v265
    %527 = vmatpush1.msra.mxu0 %v264
    %528 = vmatprep.subr.mxu0 %v263
    %529 = vmatpush1.msra.mxu0 %v262
    %530 = vmatprep.subr.mxu0 %v261
    %531 = vmatpush1.msra.mxu0 %v260
    %532 = vmatprep.subr.mxu0 %v259
    %533 = vmatpush1.msra.mxu0 %v258
    %534 = vmatprep.subr.mxu0 %v257
    %535 = vmatpush1.msra.mxu0 %v256
    %536 = vmatprep.subr.mxu0 %v255
    %537 = vmatpush1.msra.mxu0 %v254
    %538 = vmatprep.subr.mxu0 %v253
    %539 = vmatpush1.msra.mxu0 %v252
    %540 = vmatprep.subr.mxu0 %v251
    %541 = vmatpush1.msra.mxu0 %v250
    %542 = vmatprep.subr.mxu0 %v249
    %543 = vmatpush1.msra.mxu0 %v248
    %544 = vmatprep.subr.mxu0 %v247
    %545 = vmatpush1.msra.mxu0 %v246
    %546 = vmatprep.subr.mxu0 %v245
    %547 = vmatpush1.msra.mxu0 %v244
    %548 = vmatprep.subr.mxu0 %v243
    %549 = vmatpush1.msra.mxu0 %v242
    %550 = vmatprep.subr.mxu0 %v241
    %551 = vmatpush1.msra.mxu0 %v240
    %552 = vmatprep.subr.mxu0 %v239
    %553 = vmatpush1.msra.mxu0 %v238
    %554 = vmatprep.subr.mxu0 0.0
    %555 = vmatpush2.msra.mxu0 0.0
    %556 = vmatprep.subr.mxu0 0.0
    %557 = vmatpush2.msra.mxu0 0.0
    %558 = vmatprep.subr.mxu0 0.0
    %559 = vmatpush2.msra.mxu0 0.0
    %560 = vmatprep.subr.mxu0 0.0
    %561 = vmatpush2.msra.mxu0 0.0
    %562 = vmatprep.subr.mxu0 0.0
    %563 = vmatpush2.msra.mxu0 0.0
    %564 = vmatprep.subr.mxu0 0.0
    %565 = vmatpush2.msra.mxu0 0.0
    %566 = vmatprep.subr.mxu0 0.0
    %567 = vmatpush2.msra.mxu0 0.0
    %568 = vmatprep.subr.mxu0 0.0
    %569 = vmatpush2.msra.mxu0 0.0
    %570 = vmatprep.subr.mxu0 0.0
    %571 = vmatpush2.msra.mxu0 0.0
    %572 = vmatprep.subr.mxu0 0.0
    %573 = vmatpush2.msra.mxu0 0.0
    %574 = vmatprep.subr.mxu0 0.0
    %575 = vmatpush2.msra.mxu0 0.0
    %576 = vmatprep.subr.mxu0 0.0
    %577 = vmatpush2.msra.mxu0 0.0
    %578 = vmatprep.subr.mxu0 0.0
    %579 = vmatpush2.msra.mxu0 0.0
    %580 = vmatprep.subr.mxu0 0.0
    %581 = vmatpush2.msra.mxu0 0.0
    %582 = vmatprep.subr.mxu0 0.0
    %583 = vmatpush2.msra.mxu0 0.0
    %584 = vmatprep.subr.mxu0 0.0
    %585 = vmatpush2.msra.mxu0 0.0
    %586 = vmatprep.mubr.f32.mxu0 0.0
    %587 = vmatmul.mubr.f32.gmra.mxu0 %v521
    %v588 = vpop.f32.mrf.mxu0
    %v589 = vadd.f32 0.0, %v588
    %v590 = vpop.f32.mrf.mxu0
    %v591 = vadd.f32 0.0, %v590
    %592 = vdwg.mxu0
    %v593 = vadd.f32 %v589, %v373
    %v594 = vlaneseq
    %v595 = vshrl.u32 %v594, 7
    %v596 = vsub.s32 0, %v595
    %v597 = vrot.slane %v502, %v596
    %v598 = vmul.f32 %v497, %v597
    %v599 = vadd.f32 %v493, %v598
    %v600 = vsub.f32 %v493, 0.3
    %v601 = vmul.f32 %v600, 0.02
    %v602 = vsub.f32 %v599, %v601
    %v603 = vmul.f32 %v497, 0.5
    %v604 = vsub.f32 1.0, %v500
    %v605 = vmul.f32 %v603, %v604
    %v606 = vadd.f32 %v605, %v593
    %vm607 = vcmp.gt.f32.partialorder %v606, %v602
    %v608 = vsel %vm607, 1, 0
    %v609 = vcvt.s32.f32 %v608
    %v610 = vld [vmem:[%s1 + $0x3] sm:$0x1]
    %v611 = vld [vmem:[%s2 + $0x3] sm:$0x1]
    %s612 = scalar_lea.vmem [#allocation9], 24
    %v613 = vld [vmem:[%s612] sm:$0xff]
    %v614 = vadd.f32 %v613, %v591
    %v615 = vlaneseq
    %v616 = vshrl.u32 %v615, 7
    %v617 = vsub.s32 0, %v616
    %v618 = vrot.slane %v610, %v617
    %v619 = vmul.f32 %v518, %v618
    %v620 = vadd.f32 %v514, %v619
    %v621 = vsub.f32 %v514, 0.3
    %v622 = vmul.f32 %v621, 0.02
    %v623 = vsub.f32 %v620, %v622
    %v624 = vmul.f32 %v518, 0.5
    %v625 = vsub.f32 1.0, %v521
    %v626 = vmul.f32 %v624, %v625
    %v627 = vadd.f32 %v626, %v614
    %vm628 = vcmp.gt.f32.partialorder %v627, %v623
    %v629 = vsel %vm628, 1, 0
    %v630 = vcvt.s32.f32 %v629
    %631 = vmatprep.subr.mxu0 %v269
    %632 = vmatpush1.msra.mxu0 %v268
    %633 = vmatprep.subr.mxu0 %v267
    %634 = vmatpush1.msra.mxu0 %v266
    %635 = vmatprep.subr.mxu0 %v265
    %636 = vmatpush1.msra.mxu0 %v264
    %637 = vmatprep.subr.mxu0 %v263
    %638 = vmatpush1.msra.mxu0 %v262
    %639 = vmatprep.subr.mxu0 %v261
    %640 = vmatpush1.msra.mxu0 %v260
    %641 = vmatprep.subr.mxu0 %v259
    %642 = vmatpush1.msra.mxu0 %v258
    %643 = vmatprep.subr.mxu0 %v257
    %644 = vmatpush1.msra.mxu0 %v256
    %645 = vmatprep.subr.mxu0 %v255
    %646 = vmatpush1.msra.mxu0 %v254
    %647 = vmatprep.subr.mxu0 %v253
    %648 = vmatpush1.msra.mxu0 %v252
    %649 = vmatprep.subr.mxu0 %v251
    %650 = vmatpush1.msra.mxu0 %v250
    %651 = vmatprep.subr.mxu0 %v249
    %652 = vmatpush1.msra.mxu0 %v248
    %653 = vmatprep.subr.mxu0 %v247
    %654 = vmatpush1.msra.mxu0 %v246
    %655 = vmatprep.subr.mxu0 %v245
    %656 = vmatpush1.msra.mxu0 %v244
    %657 = vmatprep.subr.mxu0 %v243
    %658 = vmatpush1.msra.mxu0 %v242
    %659 = vmatprep.subr.mxu0 %v241
    %660 = vmatpush1.msra.mxu0 %v240
    %661 = vmatprep.subr.mxu0 %v239
    %662 = vmatpush1.msra.mxu0 %v238
    %663 = vmatprep.subr.mxu0 0.0
    %664 = vmatpush2.msra.mxu0 0.0
    %665 = vmatprep.subr.mxu0 0.0
    %666 = vmatpush2.msra.mxu0 0.0
    %667 = vmatprep.subr.mxu0 0.0
    %668 = vmatpush2.msra.mxu0 0.0
    %669 = vmatprep.subr.mxu0 0.0
    %670 = vmatpush2.msra.mxu0 0.0
    %671 = vmatprep.subr.mxu0 0.0
    %672 = vmatpush2.msra.mxu0 0.0
    %673 = vmatprep.subr.mxu0 0.0
    %674 = vmatpush2.msra.mxu0 0.0
    %675 = vmatprep.subr.mxu0 0.0
    %676 = vmatpush2.msra.mxu0 0.0
    %677 = vmatprep.subr.mxu0 0.0
    %678 = vmatpush2.msra.mxu0 0.0
    %679 = vmatprep.subr.mxu0 0.0
    %680 = vmatpush2.msra.mxu0 0.0
    %681 = vmatprep.subr.mxu0 0.0
    %682 = vmatpush2.msra.mxu0 0.0
    %683 = vmatprep.subr.mxu0 0.0
    %684 = vmatpush2.msra.mxu0 0.0
    %685 = vmatprep.subr.mxu0 0.0
    %686 = vmatpush2.msra.mxu0 0.0
    %687 = vmatprep.subr.mxu0 0.0
    %688 = vmatpush2.msra.mxu0 0.0
    %689 = vmatprep.subr.mxu0 0.0
    %690 = vmatpush2.msra.mxu0 0.0
    %691 = vmatprep.subr.mxu0 0.0
    %692 = vmatpush2.msra.mxu0 0.0
    %693 = vmatprep.subr.mxu0 0.0
    %694 = vmatpush2.msra.mxu0 0.0
    %695 = vmatprep.mubr.f32.mxu0 0.0
    %696 = vmatmul.mubr.f32.gmra.mxu0 %v630
    %v697 = vpop.f32.mrf.mxu0
    %v698 = vadd.f32 0.0, %v697
    %v699 = vpop.f32.mrf.mxu0
    %v700 = vadd.f32 0.0, %v699
    %701 = vdwg.mxu0
    %v702 = vadd.f32 %v698, %v373
    %v703 = vlaneseq
    %v704 = vshrl.u32 %v703, 7
    %v705 = vsub.s32 0, %v704
    %v706 = vrot.slane %v611, %v705
    %v707 = vmul.f32 %v606, %v706
    %v708 = vadd.f32 %v602, %v707
    %v709 = vsub.f32 %v602, 0.3
    %v710 = vmul.f32 %v709, 0.02
    %v711 = vsub.f32 %v708, %v710
    %v712 = vmul.f32 %v606, 0.5
    %v713 = vsub.f32 1.0, %v609
    %v714 = vmul.f32 %v712, %v713
    %v715 = vadd.f32 %v714, %v702
    %vm716 = vcmp.gt.f32.partialorder %v715, %v711
    %v717 = vsel %vm716, 1, 0
    %v718 = vcvt.s32.f32 %v717
    %v719 = vld [vmem:[%s1 + $0x4] sm:$0x1]
    %v720 = vld [vmem:[%s2 + $0x4] sm:$0x1]
    %s721 = scalar_lea.vmem [#allocation9], 32
    %v722 = vld [vmem:[%s721] sm:$0xff]
    %v723 = vadd.f32 %v722, %v700
    %v724 = vlaneseq
    %v725 = vshrl.u32 %v724, 7
    %v726 = vsub.s32 0, %v725
    %v727 = vrot.slane %v719, %v726
    %v728 = vmul.f32 %v627, %v727
    %v729 = vadd.f32 %v623, %v728
    %v730 = vsub.f32 %v623, 0.3
    %v731 = vmul.f32 %v730, 0.02
    %v732 = vsub.f32 %v729, %v731
    %v733 = vmul.f32 %v627, 0.5
    %v734 = vsub.f32 1.0, %v630
    %v735 = vmul.f32 %v733, %v734
    %v736 = vadd.f32 %v735, %v723
    %vm737 = vcmp.gt.f32.partialorder %v736, %v732
    %v738 = vsel %vm737, 1, 0
    %v739 = vcvt.s32.f32 %v738
    %740 = vmatprep.subr.mxu0 %v269
    %741 = vmatpush1.msra.mxu0 %v268
    %742 = vmatprep.subr.mxu0 %v267
    %743 = vmatpush1.msra.mxu0 %v266
    %744 = vmatprep.subr.mxu0 %v265
    %745 = vmatpush1.msra.mxu0 %v264
    %746 = vmatprep.subr.mxu0 %v263
    %747 = vmatpush1.msra.mxu0 %v262
    %748 = vmatprep.subr.mxu0 %v261
    %749 = vmatpush1.msra.mxu0 %v260
    %750 = vmatprep.subr.mxu0 %v259
    %751 = vmatpush1.msra.mxu0 %v258
    %752 = vmatprep.subr.mxu0 %v257
    %753 = vmatpush1.msra.mxu0 %v256
    %754 = vmatprep.subr.mxu0 %v255
    %755 = vmatpush1.msra.mxu0 %v254
    %756 = vmatprep.subr.mxu0 %v253
    %757 = vmatpush1.msra.mxu0 %v252
    %758 = vmatprep.subr.mxu0 %v251
    %759 = vmatpush1.msra.mxu0 %v250
    %760 = vmatprep.subr.mxu0 %v249
    %761 = vmatpush1.msra.mxu0 %v248
    %762 = vmatprep.subr.mxu0 %v247
    %763 = vmatpush1.msra.mxu0 %v246
    %764 = vmatprep.subr.mxu0 %v245
    %765 = vmatpush1.msra.mxu0 %v244
    %766 = vmatprep.subr.mxu0 %v243
    %767 = vmatpush1.msra.mxu0 %v242
    %768 = vmatprep.subr.mxu0 %v241
    %769 = vmatpush1.msra.mxu0 %v240
    %770 = vmatprep.subr.mxu0 %v239
    %771 = vmatpush1.msra.mxu0 %v238
    %772 = vmatprep.subr.mxu0 0.0
    %773 = vmatpush2.msra.mxu0 0.0
    %774 = vmatprep.subr.mxu0 0.0
    %775 = vmatpush2.msra.mxu0 0.0
    %776 = vmatprep.subr.mxu0 0.0
    %777 = vmatpush2.msra.mxu0 0.0
    %778 = vmatprep.subr.mxu0 0.0
    %779 = vmatpush2.msra.mxu0 0.0
    %780 = vmatprep.subr.mxu0 0.0
    %781 = vmatpush2.msra.mxu0 0.0
    %782 = vmatprep.subr.mxu0 0.0
    %783 = vmatpush2.msra.mxu0 0.0
    %784 = vmatprep.subr.mxu0 0.0
    %785 = vmatpush2.msra.mxu0 0.0
    %786 = vmatprep.subr.mxu0 0.0
    %787 = vmatpush2.msra.mxu0 0.0
    %788 = vmatprep.subr.mxu0 0.0
    %789 = vmatpush2.msra.mxu0 0.0
    %790 = vmatprep.subr.mxu0 0.0
    %791 = vmatpush2.msra.mxu0 0.0
    %792 = vmatprep.subr.mxu0 0.0
    %793 = vmatpush2.msra.mxu0 0.0
    %794 = vmatprep.subr.mxu0 0.0
    %795 = vmatpush2.msra.mxu0 0.0
    %796 = vmatprep.subr.mxu0 0.0
    %797 = vmatpush2.msra.mxu0 0.0
    %798 = vmatprep.subr.mxu0 0.0
    %799 = vmatpush2.msra.mxu0 0.0
    %800 = vmatprep.subr.mxu0 0.0
    %801 = vmatpush2.msra.mxu0 0.0
    %802 = vmatprep.subr.mxu0 0.0
    %803 = vmatpush2.msra.mxu0 0.0
    %804 = vmatprep.mubr.f32.mxu0 0.0
    %805 = vmatmul.mubr.f32.gmra.mxu0 %v739
    %v806 = vpop.f32.mrf.mxu0
    %v807 = vadd.f32 0.0, %v806
    %v808 = vpop.f32.mrf.mxu0
    %v809 = vadd.f32 0.0, %v808
    %810 = vdwg.mxu0
    %v811 = vadd.f32 %v807, %v373
    %v812 = vlaneseq
    %v813 = vshrl.u32 %v812, 7
    %v814 = vsub.s32 0, %v813
    %v815 = vrot.slane %v720, %v814
    %v816 = vmul.f32 %v715, %v815
    %v817 = vadd.f32 %v711, %v816
    %v818 = vsub.f32 %v711, 0.3
    %v819 = vmul.f32 %v818, 0.02
    %v820 = vsub.f32 %v817, %v819
    %v821 = vmul.f32 %v715, 0.5
    %v822 = vsub.f32 1.0, %v718
    %v823 = vmul.f32 %v821, %v822
    %v824 = vadd.f32 %v823, %v811
    %vm825 = vcmp.gt.f32.partialorder %v824, %v820
    %v826 = vsel %vm825, 1, 0
    %v827 = vcvt.s32.f32 %v826
    %v828 = vld [vmem:[%s1 + $0x5] sm:$0x1]
    %v829 = vld [vmem:[%s2 + $0x5] sm:$0x1]
    %s830 = scalar_lea.vmem [#allocation9], 40
    %v831 = vld [vmem:[%s830] sm:$0xff]
    %v832 = vadd.f32 %v831, %v809
    %v833 = vlaneseq
    %v834 = vshrl.u32 %v833, 7
    %v835 = vsub.s32 0, %v834
    %v836 = vrot.slane %v828, %v835
    %v837 = vmul.f32 %v736, %v836
    %v838 = vadd.f32 %v732, %v837
    %v839 = vsub.f32 %v732, 0.3
    %v840 = vmul.f32 %v839, 0.02
    %v841 = vsub.f32 %v838, %v840
    %v842 = vmul.f32 %v736, 0.5
    %v843 = vsub.f32 1.0, %v739
    %v844 = vmul.f32 %v842, %v843
    %v845 = vadd.f32 %v844, %v832
    %vm846 = vcmp.gt.f32.partialorder %v845, %v841
    %v847 = vsel %vm846, 1, 0
    %v848 = vcvt.s32.f32 %v847
    %849 = vmatprep.subr.mxu0 %v269
    %850 = vmatpush1.msra.mxu0 %v268
    %851 = vmatprep.subr.mxu0 %v267
    %852 = vmatpush1.msra.mxu0 %v266
    %853 = vmatprep.subr.mxu0 %v265
    %854 = vmatpush1.msra.mxu0 %v264
    %855 = vmatprep.subr.mxu0 %v263
    %856 = vmatpush1.msra.mxu0 %v262
    %857 = vmatprep.subr.mxu0 %v261
    %858 = vmatpush1.msra.mxu0 %v260
    %859 = vmatprep.subr.mxu0 %v259
    %860 = vmatpush1.msra.mxu0 %v258
    %861 = vmatprep.subr.mxu0 %v257
    %862 = vmatpush1.msra.mxu0 %v256
    %863 = vmatprep.subr.mxu0 %v255
    %864 = vmatpush1.msra.mxu0 %v254
    %865 = vmatprep.subr.mxu0 %v253
    %866 = vmatpush1.msra.mxu0 %v252
    %867 = vmatprep.subr.mxu0 %v251
    %868 = vmatpush1.msra.mxu0 %v250
    %869 = vmatprep.subr.mxu0 %v249
    %870 = vmatpush1.msra.mxu0 %v248
    %871 = vmatprep.subr.mxu0 %v247
    %872 = vmatpush1.msra.mxu0 %v246
    %873 = vmatprep.subr.mxu0 %v245
    %874 = vmatpush1.msra.mxu0 %v244
    %875 = vmatprep.subr.mxu0 %v243
    %876 = vmatpush1.msra.mxu0 %v242
    %877 = vmatprep.subr.mxu0 %v241
    %878 = vmatpush1.msra.mxu0 %v240
    %879 = vmatprep.subr.mxu0 %v239
    %880 = vmatpush1.msra.mxu0 %v238
    %881 = vmatprep.subr.mxu0 0.0
    %882 = vmatpush2.msra.mxu0 0.0
    %883 = vmatprep.subr.mxu0 0.0
    %884 = vmatpush2.msra.mxu0 0.0
    %885 = vmatprep.subr.mxu0 0.0
    %886 = vmatpush2.msra.mxu0 0.0
    %887 = vmatprep.subr.mxu0 0.0
    %888 = vmatpush2.msra.mxu0 0.0
    %889 = vmatprep.subr.mxu0 0.0
    %890 = vmatpush2.msra.mxu0 0.0
    %891 = vmatprep.subr.mxu0 0.0
    %892 = vmatpush2.msra.mxu0 0.0
    %893 = vmatprep.subr.mxu0 0.0
    %894 = vmatpush2.msra.mxu0 0.0
    %895 = vmatprep.subr.mxu0 0.0
    %896 = vmatpush2.msra.mxu0 0.0
    %897 = vmatprep.subr.mxu0 0.0
    %898 = vmatpush2.msra.mxu0 0.0
    %899 = vmatprep.subr.mxu0 0.0
    %900 = vmatpush2.msra.mxu0 0.0
    %901 = vmatprep.subr.mxu0 0.0
    %902 = vmatpush2.msra.mxu0 0.0
    %903 = vmatprep.subr.mxu0 0.0
    %904 = vmatpush2.msra.mxu0 0.0
    %905 = vmatprep.subr.mxu0 0.0
    %906 = vmatpush2.msra.mxu0 0.0
    %907 = vmatprep.subr.mxu0 0.0
    %908 = vmatpush2.msra.mxu0 0.0
    %909 = vmatprep.subr.mxu0 0.0
    %910 = vmatpush2.msra.mxu0 0.0
    %911 = vmatprep.subr.mxu0 0.0
    %912 = vmatpush2.msra.mxu0 0.0
    %913 = vmatprep.mubr.f32.mxu0 0.0
    %914 = vmatmul.mubr.f32.gmra.mxu0 %v848
    %v915 = vpop.f32.mrf.mxu0
    %v916 = vadd.f32 0.0, %v915
    %v917 = vpop.f32.mrf.mxu0
    %v918 = vadd.f32 0.0, %v917
    %919 = vdwg.mxu0
    %v920 = vadd.f32 %v916, %v373
    %v921 = vlaneseq
    %v922 = vshrl.u32 %v921, 7
    %v923 = vsub.s32 0, %v922
    %v924 = vrot.slane %v829, %v923
    %v925 = vmul.f32 %v824, %v924
    %v926 = vadd.f32 %v820, %v925
    %v927 = vsub.f32 %v820, 0.3
    %v928 = vmul.f32 %v927, 0.02
    %v929 = vsub.f32 %v926, %v928
    %v930 = vmul.f32 %v824, 0.5
    %v931 = vsub.f32 1.0, %v827
    %v932 = vmul.f32 %v930, %v931
    %v933 = vadd.f32 %v932, %v920
    %vm934 = vcmp.gt.f32.partialorder %v933, %v929
    %v935 = vsel %vm934, 1, 0
    %v936 = vcvt.s32.f32 %v935
    %v937 = vld [vmem:[%s1 + $0x6] sm:$0x1]
    %v938 = vld [vmem:[%s2 + $0x6] sm:$0x1]
    %s939 = scalar_lea.vmem [#allocation9], 48
    %v940 = vld [vmem:[%s939] sm:$0xff]
    %v941 = vadd.f32 %v940, %v918
    %v942 = vlaneseq
    %v943 = vshrl.u32 %v942, 7
    %v944 = vsub.s32 0, %v943
    %v945 = vrot.slane %v937, %v944
    %v946 = vmul.f32 %v845, %v945
    %v947 = vadd.f32 %v841, %v946
    %v948 = vsub.f32 %v841, 0.3
    %v949 = vmul.f32 %v948, 0.02
    %v950 = vsub.f32 %v947, %v949
    %v951 = vmul.f32 %v845, 0.5
    %v952 = vsub.f32 1.0, %v848
    %v953 = vmul.f32 %v951, %v952
    %v954 = vadd.f32 %v953, %v941
    %vm955 = vcmp.gt.f32.partialorder %v954, %v950
    %v956 = vsel %vm955, 1, 0
    %v957 = vcvt.s32.f32 %v956
    %958 = vmatprep.subr.mxu0 %v269
    %959 = vmatpush1.msra.mxu0 %v268
    %960 = vmatprep.subr.mxu0 %v267
    %961 = vmatpush1.msra.mxu0 %v266
    %962 = vmatprep.subr.mxu0 %v265
    %963 = vmatpush1.msra.mxu0 %v264
    %964 = vmatprep.subr.mxu0 %v263
    %965 = vmatpush1.msra.mxu0 %v262
    %966 = vmatprep.subr.mxu0 %v261
    %967 = vmatpush1.msra.mxu0 %v260
    %968 = vmatprep.subr.mxu0 %v259
    %969 = vmatpush1.msra.mxu0 %v258
    %970 = vmatprep.subr.mxu0 %v257
    %971 = vmatpush1.msra.mxu0 %v256
    %972 = vmatprep.subr.mxu0 %v255
    %973 = vmatpush1.msra.mxu0 %v254
    %974 = vmatprep.subr.mxu0 %v253
    %975 = vmatpush1.msra.mxu0 %v252
    %976 = vmatprep.subr.mxu0 %v251
    %977 = vmatpush1.msra.mxu0 %v250
    %978 = vmatprep.subr.mxu0 %v249
    %979 = vmatpush1.msra.mxu0 %v248
    %980 = vmatprep.subr.mxu0 %v247
    %981 = vmatpush1.msra.mxu0 %v246
    %982 = vmatprep.subr.mxu0 %v245
    %983 = vmatpush1.msra.mxu0 %v244
    %984 = vmatprep.subr.mxu0 %v243
    %985 = vmatpush1.msra.mxu0 %v242
    %986 = vmatprep.subr.mxu0 %v241
    %987 = vmatpush1.msra.mxu0 %v240
    %988 = vmatprep.subr.mxu0 %v239
    %989 = vmatpush1.msra.mxu0 %v238
    %990 = vmatprep.subr.mxu0 0.0
    %991 = vmatpush2.msra.mxu0 0.0
    %992 = vmatprep.subr.mxu0 0.0
    %993 = vmatpush2.msra.mxu0 0.0
    %994 = vmatprep.subr.mxu0 0.0
    %995 = vmatpush2.msra.mxu0 0.0
    %996 = vmatprep.subr.mxu0 0.0
    %997 = vmatpush2.msra.mxu0 0.0
    %998 = vmatprep.subr.mxu0 0.0
    %999 = vmatpush2.msra.mxu0 0.0
    %1000 = vmatprep.subr.mxu0 0.0
    %1001 = vmatpush2.msra.mxu0 0.0
    %1002 = vmatprep.subr.mxu0 0.0
    %1003 = vmatpush2.msra.mxu0 0.0
    %1004 = vmatprep.subr.mxu0 0.0
    %1005 = vmatpush2.msra.mxu0 0.0
    %1006 = vmatprep.subr.mxu0 0.0
    %1007 = vmatpush2.msra.mxu0 0.0
    %1008 = vmatprep.subr.mxu0 0.0
    %1009 = vmatpush2.msra.mxu0 0.0
    %1010 = vmatprep.subr.mxu0 0.0
    %1011 = vmatpush2.msra.mxu0 0.0
    %1012 = vmatprep.subr.mxu0 0.0
    %1013 = vmatpush2.msra.mxu0 0.0
    %1014 = vmatprep.subr.mxu0 0.0
    %1015 = vmatpush2.msra.mxu0 0.0
    %1016 = vmatprep.subr.mxu0 0.0
    %1017 = vmatpush2.msra.mxu0 0.0
    %1018 = vmatprep.subr.mxu0 0.0
    %1019 = vmatpush2.msra.mxu0 0.0
    %1020 = vmatprep.subr.mxu0 0.0
    %1021 = vmatpush2.msra.mxu0 0.0
    %1022 = vmatprep.mubr.f32.mxu0 0.0
    %1023 = vmatmul.mubr.f32.gmra.mxu0 %v957
    %v1024 = vpop.f32.mrf.mxu0
    %v1025 = vadd.f32 0.0, %v1024
    %v1026 = vpop.f32.mrf.mxu0
    %v1027 = vadd.f32 0.0, %v1026
    %1028 = vdwg.mxu0
    %v1029 = vadd.f32 %v1025, %v373
    %v1030 = vlaneseq
    %v1031 = vshrl.u32 %v1030, 7
    %v1032 = vsub.s32 0, %v1031
    %v1033 = vrot.slane %v938, %v1032
    %v1034 = vmul.f32 %v933, %v1033
    %v1035 = vadd.f32 %v929, %v1034
    %v1036 = vsub.f32 %v929, 0.3
    %v1037 = vmul.f32 %v1036, 0.02
    %v1038 = vsub.f32 %v1035, %v1037
    %v1039 = vmul.f32 %v933, 0.5
    %v1040 = vsub.f32 1.0, %v936
    %v1041 = vmul.f32 %v1039, %v1040
    %v1042 = vadd.f32 %v1041, %v1029
    %vm1043 = vcmp.gt.f32.partialorder %v1042, %v1038
    %v1044 = vsel %vm1043, 1, 0
    %v1045 = vcvt.s32.f32 %v1044
    %v1046 = vld [vmem:[%s1 + $0x7] sm:$0x1]
    %v1047 = vld [vmem:[%s2 + $0x7] sm:$0x1]
    %s1048 = scalar_lea.vmem [#allocation9], 56
    %v1049 = vld [vmem:[%s1048] sm:$0xff]
    %v1050 = vadd.f32 %v1049, %v1027
    %v1051 = vlaneseq
    %v1052 = vshrl.u32 %v1051, 7
    %v1053 = vsub.s32 0, %v1052
    %v1054 = vrot.slane %v1046, %v1053
    %v1055 = vmul.f32 %v954, %v1054
    %v1056 = vadd.f32 %v950, %v1055
    %v1057 = vsub.f32 %v950, 0.3
    %v1058 = vmul.f32 %v1057, 0.02
    %v1059 = vsub.f32 %v1056, %v1058
    %v1060 = vmul.f32 %v954, 0.5
    %v1061 = vsub.f32 1.0, %v957
    %v1062 = vmul.f32 %v1060, %v1061
    %v1063 = vadd.f32 %v1062, %v1050
    %vm1064 = vcmp.gt.f32.partialorder %v1063, %v1059
    %v1065 = vsel %vm1064, 1, 0
    %v1066 = vcvt.s32.f32 %v1065
    %1067 = vmatprep.subr.mxu0 %v269
    %1068 = vmatpush1.msra.mxu0 %v268
    %1069 = vmatprep.subr.mxu0 %v267
    %1070 = vmatpush1.msra.mxu0 %v266
    %1071 = vmatprep.subr.mxu0 %v265
    %1072 = vmatpush1.msra.mxu0 %v264
    %1073 = vmatprep.subr.mxu0 %v263
    %1074 = vmatpush1.msra.mxu0 %v262
    %1075 = vmatprep.subr.mxu0 %v261
    %1076 = vmatpush1.msra.mxu0 %v260
    %1077 = vmatprep.subr.mxu0 %v259
    %1078 = vmatpush1.msra.mxu0 %v258
    %1079 = vmatprep.subr.mxu0 %v257
    %1080 = vmatpush1.msra.mxu0 %v256
    %1081 = vmatprep.subr.mxu0 %v255
    %1082 = vmatpush1.msra.mxu0 %v254
    %1083 = vmatprep.subr.mxu0 %v253
    %1084 = vmatpush1.msra.mxu0 %v252
    %1085 = vmatprep.subr.mxu0 %v251
    %1086 = vmatpush1.msra.mxu0 %v250
    %1087 = vmatprep.subr.mxu0 %v249
    %1088 = vmatpush1.msra.mxu0 %v248
    %1089 = vmatprep.subr.mxu0 %v247
    %1090 = vmatpush1.msra.mxu0 %v246
    %1091 = vmatprep.subr.mxu0 %v245
    %1092 = vmatpush1.msra.mxu0 %v244
    %1093 = vmatprep.subr.mxu0 %v243
    %1094 = vmatpush1.msra.mxu0 %v242
    %1095 = vmatprep.subr.mxu0 %v241
    %1096 = vmatpush1.msra.mxu0 %v240
    %1097 = vmatprep.subr.mxu0 %v239
    %1098 = vmatpush1.msra.mxu0 %v238
    %1099 = vmatprep.subr.mxu0 0.0
    %1100 = vmatpush2.msra.mxu0 0.0
    %1101 = vmatprep.subr.mxu0 0.0
    %1102 = vmatpush2.msra.mxu0 0.0
    %1103 = vmatprep.subr.mxu0 0.0
    %1104 = vmatpush2.msra.mxu0 0.0
    %1105 = vmatprep.subr.mxu0 0.0
    %1106 = vmatpush2.msra.mxu0 0.0
    %1107 = vmatprep.subr.mxu0 0.0
    %1108 = vmatpush2.msra.mxu0 0.0
    %1109 = vmatprep.subr.mxu0 0.0
    %1110 = vmatpush2.msra.mxu0 0.0
    %1111 = vmatprep.subr.mxu0 0.0
    %1112 = vmatpush2.msra.mxu0 0.0
    %1113 = vmatprep.subr.mxu0 0.0
    %1114 = vmatpush2.msra.mxu0 0.0
    %1115 = vmatprep.subr.mxu0 0.0
    %1116 = vmatpush2.msra.mxu0 0.0
    %1117 = vmatprep.subr.mxu0 0.0
    %1118 = vmatpush2.msra.mxu0 0.0
    %1119 = vmatprep.subr.mxu0 0.0
    %1120 = vmatpush2.msra.mxu0 0.0
    %1121 = vmatprep.subr.mxu0 0.0
    %1122 = vmatpush2.msra.mxu0 0.0
    %1123 = vmatprep.subr.mxu0 0.0
    %1124 = vmatpush2.msra.mxu0 0.0
    %1125 = vmatprep.subr.mxu0 0.0
    %1126 = vmatpush2.msra.mxu0 0.0
    %1127 = vmatprep.subr.mxu0 0.0
    %1128 = vmatpush2.msra.mxu0 0.0
    %1129 = vmatprep.subr.mxu0 0.0
    %1130 = vmatpush2.msra.mxu0 0.0
    %1131 = vmatprep.mubr.f32.mxu0 0.0
    %1132 = vmatmul.mubr.f32.gmra.mxu0 %v1066
    %v1133 = vpop.f32.mrf.mxu0
    %v1134 = vadd.f32 0.0, %v1133
    %v1135 = vpop.f32.mrf.mxu0
    %v1136 = vadd.f32 0.0, %v1135
    %1137 = vdwg.mxu0
    %v1138 = vadd.f32 %v1134, %v373
    %v1139 = vlaneseq
    %v1140 = vshrl.u32 %v1139, 7
    %v1141 = vsub.s32 0, %v1140
    %v1142 = vrot.slane %v1047, %v1141
    %v1143 = vmul.f32 %v1042, %v1142
    %v1144 = vadd.f32 %v1038, %v1143
    %v1145 = vsub.f32 %v1038, 0.3
    %v1146 = vmul.f32 %v1145, 0.02
    %v1147 = vsub.f32 %v1144, %v1146
    %v1148 = vmul.f32 %v1042, 0.5
    %v1149 = vsub.f32 1.0, %v1045
    %v1150 = vmul.f32 %v1148, %v1149
    %v1151 = vadd.f32 %v1150, %v1138
    %vm1152 = vcmp.gt.f32.partialorder %v1151, %v1147
    %v1153 = vsel %vm1152, 1, 0
    %v1154 = vcvt.s32.f32 %v1153
    %1155 = vst [vmem:[#allocation2] sm:$0xff] %v1063
    %1156 = vst [vmem:[#allocation3] sm:$0xff] %v1066
    %1157 = vst [vmem:[#allocation4] sm:$0xff] %v1059
    %1158 = vst [vmem:[#allocation5] sm:$0xff] %v1136
    %1159 = vst [vmem:[#allocation6] sm:$0xff] %v1151
    %1160 = vst [vmem:[#allocation7] sm:$0xff] %v1154
    %1161 = vst [vmem:[#allocation8] sm:$0xff] %v1147
    // Predicated region
    $region50: #{tpu_custom_call.1} parent=1 // pred_check
      %p1162 = pneg %p61
    $region51: #{tpu_custom_call.1} parent=1 // pred_check_branch
      %1164 = sbr.rel (%p1162) target = $region53
    $region52: #{tpu_custom_call.1} parent=1 // pred_region
      %v1165 = vld [vmem:[#allocation14] sm:$0xff]
      %v1166 = vld [vmem:[#allocation14 + $0x8] sm:$0xff]
      %v1167 = vld [vmem:[#allocation14 + $0x10] sm:$0xff]
      %v1168 = vld [vmem:[#allocation14 + $0x18] sm:$0xff]
      %v1169 = vld [vmem:[#allocation14 + $0x20] sm:$0xff]
      %v1170 = vld [vmem:[#allocation14 + $0x28] sm:$0xff]
      %v1171 = vld [vmem:[#allocation14 + $0x30] sm:$0xff]
      %v1172 = vld [vmem:[#allocation14 + $0x38] sm:$0xff]
      %v1173 = vld [vmem:[#allocation14 + $0x40] sm:$0xff]
      %v1174 = vld [vmem:[#allocation14 + $0x48] sm:$0xff]
      %v1175 = vld [vmem:[#allocation14 + $0x50] sm:$0xff]
      %v1176 = vld [vmem:[#allocation14 + $0x58] sm:$0xff]
      %v1177 = vld [vmem:[#allocation14 + $0x60] sm:$0xff]
      %v1178 = vld [vmem:[#allocation14 + $0x68] sm:$0xff]
      %v1179 = vld [vmem:[#allocation14 + $0x70] sm:$0xff]
      %v1180 = vld [vmem:[#allocation14 + $0x78] sm:$0xff]
      %v1181 = vld [vmem:[%s8] sm:$0x1]
      %v1183 = vlaneseq
      %v1184 = vshrl.u32 %v1183, 7
      %v1185 = vsub.s32 0, %v1184
      %v1186 = vrot.slane %v1181, %v1185
      %1188 = vmatprep.subr.mxu0 0.0
      %1189 = vmatpush1.msra.mxu0 %v1180
      %1190 = vmatprep.subr.mxu0 0.0
      %1191 = vmatpush1.msra.mxu0 %v1179
      %1192 = vmatprep.subr.mxu0 0.0
      %1193 = vmatpush1.msra.mxu0 %v1178
      %1194 = vmatprep.subr.mxu0 0.0
      %1195 = vmatpush1.msra.mxu0 %v1177
      %1196 = vmatprep.subr.mxu0 0.0
      %1197 = vmatpush1.msra.mxu0 %v1176
      %1198 = vmatprep.subr.mxu0 0.0
      %1199 = vmatpush1.msra.mxu0 %v1175
      %1200 = vmatprep.subr.mxu0 0.0
      %1201 = vmatpush1.msra.mxu0 %v1174
      %1202 = vmatprep.subr.mxu0 0.0
      %1203 = vmatpush1.msra.mxu0 %v1173
      %1204 = vmatprep.subr.mxu0 0.0
      %1205 = vmatpush1.msra.mxu0 %v1172
      %1206 = vmatprep.subr.mxu0 0.0
      %1207 = vmatpush1.msra.mxu0 %v1171
      %1208 = vmatprep.subr.mxu0 0.0
      %1209 = vmatpush1.msra.mxu0 %v1170
      %1210 = vmatprep.subr.mxu0 0.0
      %1211 = vmatpush1.msra.mxu0 %v1169
      %1212 = vmatprep.subr.mxu0 0.0
      %1213 = vmatpush1.msra.mxu0 %v1168
      %1214 = vmatprep.subr.mxu0 0.0
      %1215 = vmatpush1.msra.mxu0 %v1167
      %1216 = vmatprep.subr.mxu0 0.0
      %1217 = vmatpush1.msra.mxu0 %v1166
      %1218 = vmatprep.subr.mxu0 0.0
      %1219 = vmatpush1.msra.mxu0 %v1165
      %1220 = vmatprep.subr.mxu0 0.0
      %1221 = vmatpush2.msra.mxu0 0.0
      %1222 = vmatprep.subr.mxu0 0.0
      %1223 = vmatpush2.msra.mxu0 0.0
      %1224 = vmatprep.subr.mxu0 0.0
      %1225 = vmatpush2.msra.mxu0 0.0
      %1226 = vmatprep.subr.mxu0 0.0
      %1227 = vmatpush2.msra.mxu0 0.0
      %1228 = vmatprep.subr.mxu0 0.0
      %1229 = vmatpush2.msra.mxu0 0.0
      %1230 = vmatprep.subr.mxu0 0.0
      %1231 = vmatpush2.msra.mxu0 0.0
      %1232 = vmatprep.subr.mxu0 0.0
      %1233 = vmatpush2.msra.mxu0 0.0
      %1234 = vmatprep.subr.mxu0 0.0
      %1235 = vmatpush2.msra.mxu0 0.0
      %1236 = vmatprep.subr.mxu0 0.0
      %1237 = vmatpush2.msra.mxu0 0.0
      %1238 = vmatprep.subr.mxu0 0.0
      %1239 = vmatpush2.msra.mxu0 0.0
      %1240 = vmatprep.subr.mxu0 0.0
      %1241 = vmatpush2.msra.mxu0 0.0
      %1242 = vmatprep.subr.mxu0 0.0
      %1243 = vmatpush2.msra.mxu0 0.0
      %1244 = vmatprep.subr.mxu0 0.0
      %1245 = vmatpush2.msra.mxu0 0.0
      %1246 = vmatprep.subr.mxu0 0.0
      %1247 = vmatpush2.msra.mxu0 0.0
      %1248 = vmatprep.subr.mxu0 0.0
      %1249 = vmatpush2.msra.mxu0 0.0
      %1250 = vmatprep.subr.mxu0 0.0
      %1251 = vmatpush2.msra.mxu0 0.0
      %1252 = vmatprep.mubr.f32.mxu0 0.0
      %1253 = vmatmul.mubr.f32.gmra.mxu0 %v1154
      %v1254 = vpop.f32.mrf.mxu0
      %v1255 = vadd.f32 %v1186, %v1254
      %v1256 = vpop.f32.mrf.mxu0
      %1257 = vdwg.mxu0
      %1258 = vst [vmem:[#allocation16] sm:$0xff] %v1255
    $region53: #{tpu_custom_call.1} parent=1 // pred_fallthru
      _
    // Predicated region
    $region54: #{tpu_custom_call.1} parent=1 // pred_check
      _
    $region55: #{tpu_custom_call.1} parent=1 // pred_check_branch
      %1260 = sbr.rel (0) target = $region57
    $region56: #{tpu_custom_call.1} parent=1 // pred_region
      %s1262 = ssub.s32 128, 128
      %1263 = vsyncadd [#allocation13], %s1262
      %s1265 = sshll.u32 [#allocation16], 4
      %s1266 = int_to_ptr.vmem [resolvable:$true] %s1265
      %1268 = dma.vmem_to_hbm [thread:$0]  %s1266, 128, %s9, [#allocation13]
    $region57: #{tpu_custom_call.1} parent=1 // pred_fallthru
      _
    // Predicated region
    $region58: #{tpu_custom_call.1} parent=1 // pred_check
      _
    $region59: #{tpu_custom_call.1} parent=1 // pred_check_branch
      %1270 = sbr.rel (0) target = $region61
    $region60: #{tpu_custom_call.1} parent=1 // pred_region
      %1271 = dma.done [#allocation13], 128
    $region61: #{tpu_custom_call.1} parent=1 // pred_fallthru
      _
    %1272 = vsyncpa [#allocation12], 1
    %1273 = vsyncpa [#allocation15], 1
    %1274 = vsyncpa [#allocation13], 1

</llo_original>
